<compile_context>
chip_gen: v7x
topology: tpu7x:2x2x1
jax: 0.10.0
libtpu: 0.0.40
codegen_flags: <defaults>
</compile_context>

<pallas_src>
import functools

import jax
import jax.numpy as jnp
from jax.experimental import pallas as pl
from jax.experimental.pallas import tpu as pltpu


def _round_up(x, m):
    return (x + m - 1) // m * m


_MIN_PALLAS_COUT = 8   # layers with fewer output channels use the XLA fallback


# ----------------------------------------------------------------------------
# Kernels
# ----------------------------------------------------------------------------
def _matmul_bias_act_kernel(x_ref, w_ref, b_ref, o_ref, *, use_leaky, slope):
    """Full-K matmul on a VMEM-resident weight, fused bias (+LeakyReLU), bf16 out."""
    y = jnp.dot(x_ref[...], w_ref[...], preferred_element_type=jnp.float32)
    y = y + b_ref[...]
    if use_leaky:
        y = jnp.where(y >= 0, y, slope * y)
    o_ref[...] = y.astype(o_ref.dtype)


def _matmul_stats_kernel(x_ref, w_ref, o_ref, stats_ref):
    """Full-K matmul emitting raw f32 pre-activations + per-tile BN partials.

    Padded M rows / K cols are exact zeros (no bias on BN layers) so they
    contribute nothing to the partial sums.
    """
    y = jnp.dot(x_ref[...], w_ref[...], preferred_element_type=jnp.float32)
    o_ref[...] = y
    s = jnp.sum(y, axis=0, keepdims=True)          # (1, CP)
    sq = jnp.sum(y * y, axis=0, keepdims=True)     # (1, CP)
    stats_ref[...] = jnp.concatenate([s, sq], axis=0).reshape(stats_ref.shape)


# ----------------------------------------------------------------------------
# Layer wrapper
# ----------------------------------------------------------------------------
def _im2col_nhwc(x, kh, kw, stride, pad):
    """x: (N, H, W, C) -> patches (N*OH*OW, KH*KW*C); K ordered (KH, KW, C)."""
    x = jnp.pad(x, ((0, 0), (pad, pad), (pad, pad), (0, 0)))
    n, h, w, c = x.shape
    oh = (h - kh) // stride + 1
    ow = (w - kw) // stride + 1
    cols = []
    for i in range(kh):
        for j in range(kw):
            cols.append(x[:, i:i + stride * oh:stride,
                             j:j + stride * ow:stride, :])
    p = jnp.stack(cols, axis=3)                    # (N, OH, OW, KH*KW, C)
    return p.reshape(n * oh * ow, kh * kw * c), oh, ow


def fused_conv_layer(x, w_p, b_p, gamma, beta, *, stride, pad, use_bn,
                     use_leaky, cout, kh, kw, tm=512, eps=1e-5, slope=0.2):
    """One Conv2d(+BN)(+LeakyReLU) layer.  x: (N,H,W,Cin) NHWC bf16."""
    n = x.shape[0]
    # TODO(synk): do patch extraction inside the kernel (halo'd NHWC row tiles,
    # 16 small dots) instead of materialising the 16x im2col expansion in HBM.
    patches, oh, ow = _im2col_nhwc(x.astype(jnp.bfloat16), kh, kw, stride, pad)
    m, k = patches.shape

    if cout < _MIN_PALLAS_COUT:
        # Tiny layer (the final 1-channel conv): Pallas would waste 127/128 MXU
        # lanes and pay two launch + pad copies for ~MFlops of work.
        y = jnp.dot(patches, w_p, preferred_element_type=jnp.float32)
        y = y + b_p[None, :]
        if use_leaky:
            y = jnp.where(y >= 0, y, slope * y)
        return y.reshape(n, oh, ow, cout)

    kp, cp = w_p.shape

    # Large 8-aligned M tile (amortises grid-step overhead and the resident
    # weight), but keep >= 2 tiles so the "parallel" axis feeds both v7x TCs.
    tm_eff = min(tm, _round_up(m, 8))
    if m > 8 and _round_up(m, tm_eff) // tm_eff < 2:
        tm_eff = max(8, _round_up((m + 1) // 2, 8))
    mp = _round_up(m, tm_eff)
    grid = (mp // tm_eff,)

    patches_p = jnp.pad(patches, ((0, mp - m), (0, kp - k)))   # already bf16

    x_spec = pl.BlockSpec((tm_eff, kp), lambda i: (i, 0))
    w_spec = pl.BlockSpec((kp, cp), lambda i: (0, 0))          # VMEM-resident
    out_bytes = 4 if use_bn else 2

    vmem_est = 2 * (tm_eff * kp * 2 + kp * cp * 2 + tm_eff * cp * out_bytes)
    cparams = pltpu.CompilerParams(
        dimension_semantics=("parallel",),
        vmem_limit_bytes=min(max(32 * 1024 * 1024, 2 * vmem_est + (1 << 20)),
                             96 * 1024 * 1024))
    ce = pl.CostEstimate(
        flops=2 * mp * kp * cp, transcendentals=0,
        bytes_accessed=mp * kp * 2 + kp * cp * 2 + mp * cp * out_bytes
        + (grid[0] * 2 * cp * 4 if use_bn else 0))

    if use_bn:
        y_pad, stats = pl.pallas_call(
            _matmul_stats_kernel,
            out_shape=(jax.ShapeDtypeStruct((mp, cp), jnp.float32),
                       jax.ShapeDtypeStruct((grid[0], 2, cp), jnp.float32)),
            grid=grid,
            in_specs=[x_spec, w_spec],
            out_specs=(pl.BlockSpec((tm_eff, cp), lambda i: (i, 0)),
                       pl.BlockSpec((1, 2, cp), lambda i: (i, 0, 0))),
            compiler_params=cparams,
            cost_estimate=ce,
        )(patches_p, w_p)

        # Cross-tile reduction + BN affine + LeakyReLU stay in XLA; the cheap
        # elementwise fuses into the next layer's patch extraction, so no extra
        # Pallas pass / activation round trip is needed.  Biased batch variance
        # matches nn.BatchNorm2d in training mode; the conv bias is cancelled
        # by mean subtraction and therefore dropped.
        y = y_pad[:m, :cout]
        mean = jnp.sum(stats[:, 0, :cout], axis=0) / m
        var = jnp.maximum(jnp.sum(stats[:, 1, :cout], axis=0) / m - mean * mean,
                          0.0)
        inv = jax.lax.rsqrt(var + eps)
        y = (y - mean[None, :]) * (gamma * inv)[None, :] + beta[None, :]
        if use_leaky:
            y = jnp.where(y >= 0, y, slope * y)
        return y.astype(jnp.bfloat16).reshape(n, oh, ow, cout)

    out = pl.pallas_call(
        functools.partial(_matmul_bias_act_kernel,
                          use_leaky=use_leaky, slope=slope),
        out_shape=jax.ShapeDtypeStruct((mp, cp), jnp.bfloat16),
        grid=grid,
        in_specs=[x_spec, w_spec, pl.BlockSpec((1, cp), lambda i: (0, 0))],
        out_specs=pl.BlockSpec((tm_eff, cp), lambda i: (i, 0)),
        compiler_params=cparams,
        cost_estimate=ce,
    )(patches_p, w_p, b_p)
    return out[:m, :cout].reshape(n, oh, ow, cout)


# ----------------------------------------------------------------------------
# Network
# ----------------------------------------------------------------------------
def init_params(key, input_nc, ndf=64, n_layers=3):
    """Deterministic synthetic params mirroring Discriminator.__init__ shapes."""
    layer_cfg = [(input_nc, ndf, 2, False, True)]            # conv1 + LeakyReLU
    nf_mult = 1
    for nlyr in range(1, n_layers):
        nf_mult_prev = nf_mult
        nf_mult = min(2 ** nlyr, 8)
        layer_cfg.append((ndf * nf_mult_prev, ndf * nf_mult, 2, True, True))
    nf_mult_prev = nf_mult
    nf_mult = min(2 ** n_layers, 8)
    layer_cfg.append((ndf * nf_mult_prev, ndf * nf_mult, 1, True, True))
    layer_cfg.append((ndf * nf_mult, 1, 1, False, False))     # final 1-ch conv

    weights, cfg = [], []
    for (cin, cout, stride, use_bn, use_leaky) in layer_cfg:
        key, k_w, k_b = jax.random.split(key, 3)
        weights.append((
            0.02 * jax.random.normal(k_w, (cout, cin, 4, 4), jnp.float32),
            0.02 * jax.random.normal(k_b, (cout,), jnp.float32),
            jnp.ones((cout,), jnp.float32),    # BN gamma default init
            jnp.zeros((cout,), jnp.float32),   # BN beta default init
        ))
        cfg.append((stride, use_bn, use_leaky, cin, cout, 4, 4))
    return tuple(weights), tuple(cfg)


def pack_params(weights, cfg):
    """Hoisted weight packing: (Cout,Cin,KH,KW) -> padded (kp, cp) bf16, once."""
    packed = []
    for (w, b, gamma, beta), (stride, use_bn, use_leaky, cin, cout, kh, kw) in zip(
            weights, cfg):
        k = kh * kw * cin
        w2d = jnp.transpose(w, (2, 3, 1, 0)).reshape(k, cout)   # (KH*KW*Cin, Cout)
        if cout < _MIN_PALLAS_COUT:
            packed.append((w2d.astype(jnp.bfloat16), b, gamma, beta))
            continue
        cp = _round_up(cout, 128)
        kp = _round_up(k, 128)
        w_p = jnp.pad(w2d, ((0, kp - k), (0, cp - cout))).astype(jnp.bfloat16)
        if use_bn:
            b_p = None   # bias cancelled by BN mean subtraction
        else:
            b_p = jnp.pad(b, (0, cp - cout)).reshape(1, cp)
        packed.append((w_p, b_p, gamma, beta))
    return tuple(packed)


@functools.partial(jax.jit, static_argnames=("cfg",))
def discriminator_forward(x_nchw, packed, cfg):
    x = jnp.transpose(x_nchw, (0, 2, 3, 1)).astype(jnp.bfloat16)  # NCHW->NHWC once
    for (w_p, b_p, gamma, beta), (stride, use_bn, use_leaky, cin, cout, kh, kw) in zip(
            packed, cfg):
        x = fused_conv_layer(x, w_p, b_p, gamma, beta, stride=stride, pad=1,
                             use_bn=use_bn, use_leaky=use_leaky,
                             cout=cout, kh=kh, kw=kw)
    return jnp.transpose(x, (0, 3, 1, 2)).astype(jnp.float32)     # NHWC->NCHW once


def reference_forward(x, weights, cfg):
    """Plain-JAX reference (lax.conv, bf16 conv operands to mirror the MXU path)."""
    for (w, b, g, bt), (stride, use_bn, use_leaky, cin, cout, kh, kw) in zip(
            weights, cfg):
        y = jax.lax.conv_general_dilated(
            x.astype(jnp.bfloat16), w.astype(jnp.bfloat16),
            window_strides=(stride, stride), padding=((1, 1), (1, 1)),
            dimension_numbers=("NCHW", "OIHW", "NCHW"),
            preferred_element_type=jnp.float32)
        y = y + b[None, :, None, None]
        if use_bn:
            mean = jnp.mean(y, axis=(0, 2, 3), keepdims=True)
            var = jnp.mean((y - mean) ** 2, axis=(0, 2, 3), keepdims=True)
            y = (y - mean) * jax.lax.rsqrt(var + 1e-5)
            y = y * g[None, :, None, None] + bt[None, :, None, None]
        if use_leaky:
            y = jnp.where(y >= 0, y, 0.2 * y)
        x = y
    return x


if __name__ == "__main__":
    key = jax.random.PRNGKey(0)
    key, kx = jax.random.split(key)

    # Small shapes consistent with the module: N=2, input_nc=4, 32x32, ndf=8,
    # n_layers=3 (32x32 is the smallest spatial size valid for 5 conv layers).
    N, INPUT_NC, H, W = 2, 4, 32, 32
    NDF, N_LAYERS = 8, 3

    x = jax.random.normal(kx, (N, INPUT_NC, H, W), jnp.float32)
    weights, cfg = init_params(key, INPUT_NC, ndf=NDF, n_layers=N_LAYERS)
    packed = pack_params(weights, cfg)            # weight packing hoisted

    out = discriminator_forward(x, packed, cfg)
    out = jax.block_until_ready(out)

    # PatchGAN output: 32 -> 16 -> 8 -> 4 -> 3 -> 2 spatial, 1 channel.
    assert out.shape == (N, 1, 2, 2), out.shape

    ref = reference_forward(x, weights, cfg)
    if not jnp.allclose(out, ref, atol=1e-2, rtol=1e-2):
        err = float(jnp.max(jnp.abs(out - ref)))
        raise AssertionError(
            f"Pallas output mismatch vs JAX reference (max |diff|={err})")

    print("KERNEL_OK")
</pallas_src>

<mosaic_0001>
module attributes {stable_mosaic.version = 11 : i64} {
  func.func @_matmul_bias_act_kernel(%arg0: i32, %arg1: memref<256x128xbf16, #tpu.memory_space<vmem>>, %arg2: memref<128x128xbf16, #tpu.memory_space<vmem>>, %arg3: memref<1x128xf32, #tpu.memory_space<vmem>>, %arg4: memref<256x128xbf16, #tpu.memory_space<vmem>>) attributes {dimension_semantics = [#tpu.dimension_semantics<parallel>], iteration_bounds = array<i64: 2>, scalar_prefetch = 0 : i64, scratch_operands = 0 : i64, tpu.core_type = #tpu.core_type<tc>, window_params = [{transform_indices = @transform_0, window_bounds = array<i64: 256, 128>}, {pipeline_mode = #tpu.pipeline_mode<synchronous>, transform_indices = @transform_1, window_bounds = array<i64: 128, 128>}, {pipeline_mode = #tpu.pipeline_mode<synchronous>, transform_indices = @transform_2, window_bounds = array<i64: 1, 128>}, {transform_indices = @transform_3, window_bounds = array<i64: 256, 128>}]} {
    %c0 = arith.constant 0 : index
    %c0_0 = arith.constant 0 : index
    %0 = vector.load %arg1[%c0, %c0_0] : memref<256x128xbf16, #tpu.memory_space<vmem>>, vector<256x128xbf16>
    %c0_1 = arith.constant 0 : index
    %c0_2 = arith.constant 0 : index
    %1 = vector.load %arg2[%c0_1, %c0_2] : memref<128x128xbf16, #tpu.memory_space<vmem>>, vector<128x128xbf16>
    %cst = arith.constant dense<0.000000e+00> : vector<256x128xf32>
    %2 = tpu.matmul %0, %1, %cst {dimension_numbers = #tpu.dot_dimension_numbers<[1], [0], [0], [1], [0, 0, 1, 1], [], []>} : vector<256x128xbf16>, vector<128x128xbf16>, vector<256x128xf32> -> vector<256x128xf32>
    %c0_3 = arith.constant 0 : index
    %c0_4 = arith.constant 0 : index
    %3 = vector.load %arg3[%c0_3, %c0_4] : memref<1x128xf32, #tpu.memory_space<vmem>>, vector<1x128xf32>
    %4 = vector.broadcast %3 : vector<1x128xf32> to vector<256x128xf32>
    %5 = arith.addf %2, %4 : vector<256x128xf32>
    %cst_5 = arith.constant 0.000000e+00 : f32
    %6 = vector.broadcast %cst_5 : f32 to vector<256x128xf32>
    %7 = arith.cmpf oge, %5, %6 : vector<256x128xf32>
    %cst_6 = arith.constant 2.000000e-01 : f32
    %8 = vector.broadcast %cst_6 : f32 to vector<256x128xf32>
    %9 = arith.mulf %8, %5 : vector<256x128xf32>
    %10 = arith.select %7, %5, %9 : vector<256x128xi1>, vector<256x128xf32>
    %11 = arith.truncf %10 : vector<256x128xf32> to vector<256x128xbf16>
    %c0_7 = arith.constant 0 : index
    %c0_8 = arith.constant 0 : index
    %12 = vector.load %arg4[%c0_7, %c0_8] : memref<256x128xbf16, #tpu.memory_space<vmem>>, vector<256x128xbf16>
    tpu.vector_store %arg4[%c0_7, %c0_8], %11 {strides = array<i32>} : memref<256x128xbf16, #tpu.memory_space<vmem>>, vector<256x128xbf16>,
    return
  }
  func.func @transform_0(%arg0: i32) -> (i32, i32) {
    %c0_i32 = arith.constant 0 : i32
    %c0_i32_0 = arith.constant 0 : i32
    return %arg0, %c0_i32 : i32, i32
  }
  func.func @transform_1(%arg0: i32) -> (i32, i32) {
    %c0_i32 = arith.constant 0 : i32
    %c0_i32_0 = arith.constant 0 : i32
    %c0_i32_1 = arith.constant 0 : i32
    return %c0_i32, %c0_i32_0 : i32, i32
  }
  func.func @transform_2(%arg0: i32) -> (i32, i32) {
    %c0_i32 = arith.constant 0 : i32
    %c0_i32_0 = arith.constant 0 : i32
    %c0_i32_1 = arith.constant 0 : i32
    return %c0_i32, %c0_i32_0 : i32, i32
  }
  func.func @transform_3(%arg0: i32) -> (i32, i32) {
    %c0_i32 = arith.constant 0 : i32
    %c0_i32_0 = arith.constant 0 : i32
    return %arg0, %c0_i32 : i32, i32
  }
}

module attributes {stable_mosaic.version = 11 : i64} {
  func.func @_matmul_stats_kernel(%arg0: i32, %arg1: memref<64x128xbf16, #tpu.memory_space<vmem>>, %arg2: memref<128x128xbf16, #tpu.memory_space<vmem>>, %arg3: memref<64x128xf32, #tpu.memory_space<vmem>>, %arg4: memref<1x2x128xf32, #tpu.memory_space<vmem>>) attributes {dimension_semantics = [#tpu.dimension_semantics<parallel>], iteration_bounds = array<i64: 2>, scalar_prefetch = 0 : i64, scratch_operands = 0 : i64, tpu.core_type = #tpu.core_type<tc>, window_params = [{transform_indices = @transform_0, window_bounds = array<i64: 64, 128>}, {pipeline_mode = #tpu.pipeline_mode<synchronous>, transform_indices = @transform_1, window_bounds = array<i64: 128, 128>}, {transform_indices = @transform_2, window_bounds = array<i64: 64, 128>}, {transform_indices = @transform_3, window_bounds = array<i64: 1, 2, 128>}]} {
    %c0 = arith.constant 0 : index
    %c0_0 = arith.constant 0 : index
    %0 = vector.load %arg1[%c0, %c0_0] : memref<64x128xbf16, #tpu.memory_space<vmem>>, vector<64x128xbf16>
    %c0_1 = arith.constant 0 : index
    %c0_2 = arith.constant 0 : index
    %1 = vector.load %arg2[%c0_1, %c0_2] : memref<128x128xbf16, #tpu.memory_space<vmem>>, vector<128x128xbf16>
    %cst = arith.constant dense<0.000000e+00> : vector<64x128xf32>
    %2 = tpu.matmul %0, %1, %cst {dimension_numbers = #tpu.dot_dimension_numbers<[1], [0], [0], [1], [0, 0, 1, 1], [], []>} : vector<64x128xbf16>, vector<128x128xbf16>, vector<64x128xf32> -> vector<64x128xf32>
    %c0_3 = arith.constant 0 : index
    %c0_4 = arith.constant 0 : index
    %3 = vector.load %arg3[%c0_3, %c0_4] : memref<64x128xf32, #tpu.memory_space<vmem>>, vector<64x128xf32>
    tpu.vector_store %arg3[%c0_3, %c0_4], %2 {strides = array<i32>} : memref<64x128xf32, #tpu.memory_space<vmem>>, vector<64x128xf32>,
    %cst_5 = arith.constant dense<0.000000e+00> : vector<128xf32>
    %4 = vector.multi_reduction <add>, %2, %cst_5 [0] : vector<64x128xf32> to vector<128xf32>
    %5 = vector.shape_cast %4 : vector<128xf32> to vector<1x128xf32>
    %6 = arith.mulf %2, %2 : vector<64x128xf32>
    %cst_6 = arith.constant dense<0.000000e+00> : vector<128xf32>
    %7 = vector.multi_reduction <add>, %6, %cst_6 [0] : vector<64x128xf32> to vector<128xf32>
    %8 = vector.shape_cast %7 : vector<128xf32> to vector<1x128xf32>
    %9 = tpu.concatenate %5, %8 in 0 : vector<1x128xf32>, vector<1x128xf32> -> vector<2x128xf32>
    %10 = vector.shape_cast %9 : vector<2x128xf32> to vector<1x2x128xf32>
    %c0_7 = arith.constant 0 : index
    %c0_8 = arith.constant 0 : index
    %c0_9 = arith.constant 0 : index
    %11 = vector.load %arg4[%c0_7, %c0_8, %c0_9] : memref<1x2x128xf32, #tpu.memory_space<vmem>>, vector<1x2x128xf32>
    tpu.vector_store %arg4[%c0_7, %c0_8, %c0_9], %10 {strides = array<i32>} : memref<1x2x128xf32, #tpu.memory_space<vmem>>, vector<1x2x128xf32>,
    return
  }
  func.func @transform_0(%arg0: i32) -> (i32, i32) {
    %c0_i32 = arith.constant 0 : i32
    %c0_i32_0 = arith.constant 0 : i32
    return %arg0, %c0_i32 : i32, i32
  }
  func.func @transform_1(%arg0: i32) -> (i32, i32) {
    %c0_i32 = arith.constant 0 : i32
    %c0_i32_0 = arith.constant 0 : i32
    %c0_i32_1 = arith.constant 0 : i32
    return %c0_i32, %c0_i32_0 : i32, i32
  }
  func.func @transform_2(%arg0: i32) -> (i32, i32) {
    %c0_i32 = arith.constant 0 : i32
    %c0_i32_0 = arith.constant 0 : i32
    return %arg0, %c0_i32 : i32, i32
  }
  func.func @transform_3(%arg0: i32) -> (i32, i32, i32) {
    %c0_i32 = arith.constant 0 : i32
    %c0_i32_0 = arith.constant 0 : i32
    %c0_i32_1 = arith.constant 0 : i32
    return %arg0, %c0_i32, %c0_i32_0 : i32, i32, i32
  }
}

module attributes {stable_mosaic.version = 11 : i64} {
  func.func @_matmul_stats_kernel(%arg0: i32, %arg1: memref<16x256xbf16, #tpu.memory_space<vmem>>, %arg2: memref<256x128xbf16, #tpu.memory_space<vmem>>, %arg3: memref<16x128xf32, #tpu.memory_space<vmem>>, %arg4: memref<1x2x128xf32, #tpu.memory_space<vmem>>) attributes {dimension_semantics = [#tpu.dimension_semantics<parallel>], iteration_bounds = array<i64: 2>, scalar_prefetch = 0 : i64, scratch_operands = 0 : i64, tpu.core_type = #tpu.core_type<tc>, window_params = [{transform_indices = @transform_0, window_bounds = array<i64: 16, 256>}, {pipeline_mode = #tpu.pipeline_mode<synchronous>, transform_indices = @transform_1, window_bounds = array<i64: 256, 128>}, {transform_indices = @transform_2, window_bounds = array<i64: 16, 128>}, {transform_indices = @transform_3, window_bounds = array<i64: 1, 2, 128>}]} {
    %c0 = arith.constant 0 : index
    %c0_0 = arith.constant 0 : index
    %0 = vector.load %arg1[%c0, %c0_0] : memref<16x256xbf16, #tpu.memory_space<vmem>>, vector<16x256xbf16>
    %c0_1 = arith.constant 0 : index
    %c0_2 = arith.constant 0 : index
    %1 = vector.load %arg2[%c0_1, %c0_2] : memref<256x128xbf16, #tpu.memory_space<vmem>>, vector<256x128xbf16>
    %cst = arith.constant dense<0.000000e+00> : vector<16x128xf32>
    %2 = tpu.matmul %0, %1, %cst {dimension_numbers = #tpu.dot_dimension_numbers<[1], [0], [0], [1], [0, 0, 1, 1], [], []>} : vector<16x256xbf16>, vector<256x128xbf16>, vector<16x128xf32> -> vector<16x128xf32>
    %c0_3 = arith.constant 0 : index
    %c0_4 = arith.constant 0 : index
    %3 = vector.load %arg3[%c0_3, %c0_4] : memref<16x128xf32, #tpu.memory_space<vmem>>, vector<16x128xf32>
    tpu.vector_store %arg3[%c0_3, %c0_4], %2 {strides = array<i32>} : memref<16x128xf32, #tpu.memory_space<vmem>>, vector<16x128xf32>,
    %cst_5 = arith.constant dense<0.000000e+00> : vector<128xf32>
    %4 = vector.multi_reduction <add>, %2, %cst_5 [0] : vector<16x128xf32> to vector<128xf32>
    %5 = vector.shape_cast %4 : vector<128xf32> to vector<1x128xf32>
    %6 = arith.mulf %2, %2 : vector<16x128xf32>
    %cst_6 = arith.constant dense<0.000000e+00> : vector<128xf32>
    %7 = vector.multi_reduction <add>, %6, %cst_6 [0] : vector<16x128xf32> to vector<128xf32>
    %8 = vector.shape_cast %7 : vector<128xf32> to vector<1x128xf32>
    %9 = tpu.concatenate %5, %8 in 0 : vector<1x128xf32>, vector<1x128xf32> -> vector<2x128xf32>
    %10 = vector.shape_cast %9 : vector<2x128xf32> to vector<1x2x128xf32>
    %c0_7 = arith.constant 0 : index
    %c0_8 = arith.constant 0 : index
    %c0_9 = arith.constant 0 : index
    %11 = vector.load %arg4[%c0_7, %c0_8, %c0_9] : memref<1x2x128xf32, #tpu.memory_space<vmem>>, vector<1x2x128xf32>
    tpu.vector_store %arg4[%c0_7, %c0_8, %c0_9], %10 {strides = array<i32>} : memref<1x2x128xf32, #tpu.memory_space<vmem>>, vector<1x2x128xf32>,
    return
  }
  func.func @transform_0(%arg0: i32) -> (i32, i32) {
    %c0_i32 = arith.constant 0 : i32
    %c0_i32_0 = arith.constant 0 : i32
    return %arg0, %c0_i32 : i32, i32
  }
  func.func @transform_1(%arg0: i32) -> (i32, i32) {
    %c0_i32 = arith.constant 0 : i32
    %c0_i32_0 = arith.constant 0 : i32
    %c0_i32_1 = arith.constant 0 : i32
    return %c0_i32, %c0_i32_0 : i32, i32
  }
  func.func @transform_2(%arg0: i32) -> (i32, i32) {
    %c0_i32 = arith.constant 0 : i32
    %c0_i32_0 = arith.constant 0 : i32
    return %arg0, %c0_i32 : i32, i32
  }
  func.func @transform_3(%arg0: i32) -> (i32, i32, i32) {
    %c0_i32 = arith.constant 0 : i32
    %c0_i32_0 = arith.constant 0 : i32
    %c0_i32_1 = arith.constant 0 : i32
    return %arg0, %c0_i32, %c0_i32_0 : i32, i32, i32
  }
}

module attributes {stable_mosaic.version = 11 : i64} {
  func.func @_matmul_stats_kernel(%arg0: i32, %arg1: memref<16x512xbf16, #tpu.memory_space<vmem>>, %arg2: memref<512x128xbf16, #tpu.memory_space<vmem>>, %arg3: memref<16x128xf32, #tpu.memory_space<vmem>>, %arg4: memref<1x2x128xf32, #tpu.memory_space<vmem>>) attributes {dimension_semantics = [#tpu.dimension_semantics<parallel>], iteration_bounds = array<i64: 2>, scalar_prefetch = 0 : i64, scratch_operands = 0 : i64, tpu.core_type = #tpu.core_type<tc>, window_params = [{transform_indices = @transform_0, window_bounds = array<i64: 16, 512>}, {pipeline_mode = #tpu.pipeline_mode<synchronous>, transform_indices = @transform_1, window_bounds = array<i64: 512, 128>}, {transform_indices = @transform_2, window_bounds = array<i64: 16, 128>}, {transform_indices = @transform_3, window_bounds = array<i64: 1, 2, 128>}]} {
    %c0 = arith.constant 0 : index
    %c0_0 = arith.constant 0 : index
    %0 = vector.load %arg1[%c0, %c0_0] : memref<16x512xbf16, #tpu.memory_space<vmem>>, vector<16x512xbf16>
    %c0_1 = arith.constant 0 : index
    %c0_2 = arith.constant 0 : index
    %1 = vector.load %arg2[%c0_1, %c0_2] : memref<512x128xbf16, #tpu.memory_space<vmem>>, vector<512x128xbf16>
    %cst = arith.constant dense<0.000000e+00> : vector<16x128xf32>
    %2 = tpu.matmul %0, %1, %cst {dimension_numbers = #tpu.dot_dimension_numbers<[1], [0], [0], [1], [0, 0, 1, 1], [], []>} : vector<16x512xbf16>, vector<512x128xbf16>, vector<16x128xf32> -> vector<16x128xf32>
    %c0_3 = arith.constant 0 : index
    %c0_4 = arith.constant 0 : index
    %3 = vector.load %arg3[%c0_3, %c0_4] : memref<16x128xf32, #tpu.memory_space<vmem>>, vector<16x128xf32>
    tpu.vector_store %arg3[%c0_3, %c0_4], %2 {strides = array<i32>} : memref<16x128xf32, #tpu.memory_space<vmem>>, vector<16x128xf32>,
    %cst_5 = arith.constant dense<0.000000e+00> : vector<128xf32>
    %4 = vector.multi_reduction <add>, %2, %cst_5 [0] : vector<16x128xf32> to vector<128xf32>
    %5 = vector.shape_cast %4 : vector<128xf32> to vector<1x128xf32>
    %6 = arith.mulf %2, %2 : vector<16x128xf32>
    %cst_6 = arith.constant dense<0.000000e+00> : vector<128xf32>
    %7 = vector.multi_reduction <add>, %6, %cst_6 [0] : vector<16x128xf32> to vector<128xf32>
    %8 = vector.shape_cast %7 : vector<128xf32> to vector<1x128xf32>
    %9 = tpu.concatenate %5, %8 in 0 : vector<1x128xf32>, vector<1x128xf32> -> vector<2x128xf32>
    %10 = vector.shape_cast %9 : vector<2x128xf32> to vector<1x2x128xf32>
    %c0_7 = arith.constant 0 : index
    %c0_8 = arith.constant 0 : index
    %c0_9 = arith.constant 0 : index
    %11 = vector.load %arg4[%c0_7, %c0_8, %c0_9] : memref<1x2x128xf32, #tpu.memory_space<vmem>>, vector<1x2x128xf32>
    tpu.vector_store %arg4[%c0_7, %c0_8, %c0_9], %10 {strides = array<i32>} : memref<1x2x128xf32, #tpu.memory_space<vmem>>, vector<1x2x128xf32>,
    return
  }
  func.func @transform_0(%arg0: i32) -> (i32, i32) {
    %c0_i32 = arith.constant 0 : i32
    %c0_i32_0 = arith.constant 0 : i32
    return %arg0, %c0_i32 : i32, i32
  }
  func.func @transform_1(%arg0: i32) -> (i32, i32) {
    %c0_i32 = arith.constant 0 : i32
    %c0_i32_0 = arith.constant 0 : i32
    %c0_i32_1 = arith.constant 0 : i32
    return %c0_i32, %c0_i32_0 : i32, i32
  }
  func.func @transform_2(%arg0: i32) -> (i32, i32) {
    %c0_i32 = arith.constant 0 : i32
    %c0_i32_0 = arith.constant 0 : i32
    return %arg0, %c0_i32 : i32, i32
  }
  func.func @transform_3(%arg0: i32) -> (i32, i32, i32) {
    %c0_i32 = arith.constant 0 : i32
    %c0_i32_0 = arith.constant 0 : i32
    %c0_i32_1 = arith.constant 0 : i32
    return %arg0, %c0_i32, %c0_i32_0 : i32, i32, i32
  }
}

</mosaic_0001>

<llo_original>
// kernel: discriminator_forward.4
$region0: #{discriminator_forward.4}
  #allocation0 [shape = 'u32[]', space=smem, size = 0x4, offset = 0x4, fixed_abs, tag = 'smem constant byte address 0x4 - core index']
  #allocation1 [shape = 'u32[144,128]{1,0:T(1,128)}', space=vmem, size = 0x12000, scoped, tag = 'internal scratch']
  %s0 = inlined_call_operand.vmem [shape: bf16[512,128], index: 0, kind: input, shape index: {}]
  %s1 = inlined_call_operand.vmem [shape: bf16[128,128], index: 1, kind: input, shape index: {}]
  %s2 = inlined_call_operand.vmem [shape: f32[1,128], index: 2, kind: input, shape index: {}]
  %s3 = inlined_call_operand.vmem [shape: bf16[512,128], index: 3, kind: output, shape index: {}]
  %s4 = sld [smem:[#allocation0]]
  $region45: #{discriminator_forward.4} parent=0
    _
  %s6 = ssub.s32 1, %s4
  %s7 = scalar_select 0, %s6, %s4
  loop: start=0, step=1, limit=4
  $region2: #{discriminator_forward.4} parent=0 // loop_pre_header
    _
  $region3: #{discriminator_forward.4} parent=0 // loop_header
    %s9 = sphi 0, %s13
    %p10 = scmp.ge.s32.totalorder %s9, 4
    %s19 = sphi 0, %s21
    %s22 = sphi 0, %s19
    %s23 = sphi 0, %s22
    %s39 = sphi 0, %s23
    %s43 = sphi 0, %s43
    %s45 = sphi 0, %s43
    %s46 = sphi 0, %s45
    %s60 = sphi 0, %s46
    %s64 = sphi 0, %s64
    %s66 = sphi 0, %s64
    %s67 = sphi 0, %s66
    %s81 = sphi 0, %s67
    %s87 = sphi 0, %s89
    %s90 = sphi 0, %s87
    %s91 = sphi 0, %s90
    %s107 = sphi 0, %s91
  $region4: #{discriminator_forward.4} parent=0 // loop_header_branch
    %12 = sbr.rel (%p10) target = $region8
  $region5: #{discriminator_forward.4} parent=0 // loop_body
    %s14 = ssub.s32 %s9, 1
    %s15 = ssub.s32 %s9, 2
    %s16 = sadd.s32 %s9, 1
    %s17 = ssub.s32 %s9, %s16
    %p18 = scmp.eq.s32.totalorder %s17, 0
    %s20 = sadd.s32 %s19, 1
    %s21 = scalar_select %p18, %s19, %s20
    %p24 = pneg %p18
    %p25 = scmp.eq.s32.totalorder %s9, 1
    %p26 = por %p24, %p25
    %p27 = scmp.ne.s32.totalorder %s19, %s22
    %p28 = scmp.eq.s32.totalorder %s9, 0
    %p29 = por %p27, %p28
    %p30 = scmp.ne.s32.totalorder %s19, %s22
    %p31 = scmp.eq.s32.totalorder %s14, 1
    %p32 = por %p30, %p31
    %p33 = scmp.ne.s32.totalorder %s22, %s23
    %p34 = scmp.eq.s32.totalorder %s14, 0
    %p35 = por %p33, %p34
    %p36 = scmp.ne.s32.totalorder %s22, %s23
    %p37 = scmp.eq.s32.totalorder %s15, 1
    %p38 = por %p36, %p37
    %p40 = scmp.ne.s32.totalorder %s23, %s39
    %p41 = scmp.eq.s32.totalorder %s15, 0
    %p42 = por %p40, %p41
    %s44 = sadd.s32 %s43, 1
    %p47 = scmp.eq.s32.totalorder %s9, 1
    %p48 = scmp.ne.s32.totalorder %s43, %s45
    %p49 = scmp.eq.s32.totalorder %s9, 0
    %p50 = por %p48, %p49
    %p51 = scmp.ne.s32.totalorder %s43, %s45
    %p52 = scmp.eq.s32.totalorder %s14, 1
    %p53 = por %p51, %p52
    %p54 = scmp.ne.s32.totalorder %s45, %s46
    %p55 = scmp.eq.s32.totalorder %s14, 0
    %p56 = por %p54, %p55
    %p57 = scmp.ne.s32.totalorder %s45, %s46
    %p58 = scmp.eq.s32.totalorder %s15, 1
    %p59 = por %p57, %p58
    %p61 = scmp.ne.s32.totalorder %s46, %s60
    %p62 = scmp.eq.s32.totalorder %s15, 0
    %p63 = por %p61, %p62
    %s65 = sadd.s32 %s64, 1
    %p68 = scmp.eq.s32.totalorder %s9, 1
    %p69 = scmp.ne.s32.totalorder %s64, %s66
    %p70 = scmp.eq.s32.totalorder %s9, 0
    %p71 = por %p69, %p70
    %p72 = scmp.ne.s32.totalorder %s64, %s66
    %p73 = scmp.eq.s32.totalorder %s14, 1
    %p74 = por %p72, %p73
    %p75 = scmp.ne.s32.totalorder %s66, %s67
    %p76 = scmp.eq.s32.totalorder %s14, 0
    %p77 = por %p75, %p76
    %p78 = scmp.ne.s32.totalorder %s66, %s67
    %p79 = scmp.eq.s32.totalorder %s15, 1
    %p80 = por %p78, %p79
    %p82 = scmp.ne.s32.totalorder %s67, %s81
    %p83 = scmp.eq.s32.totalorder %s15, 0
    %p84 = por %p82, %p83
    %s85 = ssub.s32 %s9, %s16
    %p86 = scmp.eq.s32.totalorder %s85, 0
    %s88 = sadd.s32 %s87, 1
    %s89 = scalar_select %p86, %s87, %s88
    %p92 = pneg %p86
    %p93 = scmp.eq.s32.totalorder %s9, 1
    %p94 = por %p92, %p93
    %p95 = scmp.ne.s32.totalorder %s87, %s90
    %p96 = scmp.eq.s32.totalorder %s9, 0
    %p97 = por %p95, %p96
    %p98 = scmp.ne.s32.totalorder %s87, %s90
    %p99 = scmp.eq.s32.totalorder %s14, 1
    %p100 = por %p98, %p99
    %p101 = scmp.ne.s32.totalorder %s90, %s91
    %p102 = scmp.eq.s32.totalorder %s14, 0
    %p103 = por %p101, %p102
    %p104 = scmp.ne.s32.totalorder %s90, %s91
    %p105 = scmp.eq.s32.totalorder %s15, 1
    %p106 = por %p104, %p105
    %p108 = scmp.ne.s32.totalorder %s91, %s107
    %p109 = scmp.eq.s32.totalorder %s15, 0
    %p110 = por %p108, %p109
    %p111 = scmp.le.s32.totalorder 1, %s9
    %p112 = scmp.lt.s32.totalorder %s9, 3
    %p113 = pnand %p111, %p112
    %p114 = pneg %p113
    // Predicated region
    $region9: #{discriminator_forward.4} parent=5 // pred_check
      _
    $region10: #{discriminator_forward.4} parent=5 // pred_check_branch
      %116 = sbr.rel (%p113) target = $region12
    $region11: #{discriminator_forward.4} parent=5 // pred_region
      %s117 = ssub.s32 %s9, 1
      // Predicated region
      $region13: #{discriminator_forward.4} parent=11 // pred_check
        %p118 = pneg %p56
      $region14: #{discriminator_forward.4} parent=11 // pred_check_branch
        %120 = sbr.rel (%p118) target = $region16
      $region15: #{discriminator_forward.4} parent=11 // pred_region
        _
      $region16: #{discriminator_forward.4} parent=11 // pred_fallthru
        _
      // Predicated region
      $region17: #{discriminator_forward.4} parent=11 // pred_check
        %p121 = pneg %p77
      $region18: #{discriminator_forward.4} parent=11 // pred_check_branch
        %123 = sbr.rel (%p121) target = $region20
      $region19: #{discriminator_forward.4} parent=11 // pred_region
        _
      $region20: #{discriminator_forward.4} parent=11 // pred_fallthru
        _
    $region12: #{discriminator_forward.4} parent=5 // pred_fallthru
      _
    %p124 = scmp.lt.s32.totalorder %s9, 2
    // Predicated region
    $region21: #{discriminator_forward.4} parent=5 // pred_check
      %p125 = pneg %p124
    $region22: #{discriminator_forward.4} parent=5 // pred_check_branch
      %127 = sbr.rel (%p125) target = $region24
    $region23: #{discriminator_forward.4} parent=5 // pred_region
      // Predicated region
      $region25: #{discriminator_forward.4} parent=23 // pred_check
        %p128 = pneg %p29
      $region26: #{discriminator_forward.4} parent=23 // pred_check_branch
        %130 = sbr.rel (%p128) target = $region28
      $region27: #{discriminator_forward.4} parent=23 // pred_region
        %s131 = smul.u32 32, %s9
        %p132 = scmp.lt.s32.totalorder %s131, 63
        %s133 = scalar_select %p132, %s131, 63
        %s134 = smul.addr %s133, 4
        %s135 = scalar_lea.vmem %s0, %s134
        %s136 = smul.u32 32, %s9
      $region28: #{discriminator_forward.4} parent=23 // pred_fallthru
        _
    $region24: #{discriminator_forward.4} parent=5 // pred_fallthru
      _
    %p137 = scmp.le.s32.totalorder 1, %s9
    %p138 = scmp.lt.s32.totalorder %s9, 3
    %p139 = pnand %p137, %p138
    %p140 = pneg %p139
    // Predicated region
    $region29: #{discriminator_forward.4} parent=5 // pred_check
      _
    $region30: #{discriminator_forward.4} parent=5 // pred_check_branch
      %142 = sbr.rel (%p139) target = $region32
    $region31: #{discriminator_forward.4} parent=5 // pred_region
      %s143 = ssub.s32 %s9, 1
      %s144 = smul.u32 32, %s14
      %p145 = scmp.lt.s32.totalorder %s144, 63
      %s146 = scalar_select %p145, %s144, 63
      %s147 = smul.addr %s146, 4
      %s148 = scalar_lea.vmem %s0, %s147
      %p149 = pneg %p35
      %p150 = pneg %p32
      %p151 = pneg %p56
      %p152 = pneg %p53
      %p153 = pneg %p77
      %p154 = pneg %p74
      %p155 = pneg %p103
      %p156 = pneg %p100
      %s157 = smul.u32 32, %s14
      %p158 = scmp.lt.s32.totalorder %s157, 63
      %s159 = scalar_select %p158, %s157, 63
      %s160 = smul.addr %s159, 4
      %s161 = scalar_lea.vmem %s3, %s160
      %s162 = smul.u32 32, %s14
      %p163 = scmp.lt.s32.totalorder %s162, 63
      %s164 = scalar_select %p163, %s162, 63
      %s165 = smul.addr %s164, 4
      %s166 = scalar_lea.vmem %s0, %s165
      %s167 = smul.u32 32, %s14
      %s168 = smul.u32 32, %s14
      %p169 = scmp.lt.s32.totalorder %s168, 63
      %s170 = scalar_select %p169, %s168, 63
      %s171 = smul.addr %s170, 4
      %s172 = scalar_lea.vmem %s3, %s171
      %s173 = smul.u32 32, %s14
      %v175 = vld [vmem:[%s166] sm:$0xf]
      %v176 = vld [vmem:[%s166 + $0x4] sm:$0xf]
      %v177 = vld [vmem:[%s166 + $0x8] sm:$0xf]
      %v178 = vld [vmem:[%s166 + $0xc] sm:$0xf]
      %v179 = vld [vmem:[%s166 + $0x10] sm:$0xf]
      %v180 = vld [vmem:[%s166 + $0x14] sm:$0xf]
      %v181 = vld [vmem:[%s166 + $0x18] sm:$0xf]
      %v182 = vld [vmem:[%s166 + $0x1c] sm:$0xf]
      %v183 = vld [vmem:[%s166 + $0x20] sm:$0xf]
      %v184 = vld [vmem:[%s166 + $0x24] sm:$0xf]
      %v185 = vld [vmem:[%s166 + $0x28] sm:$0xf]
      %v186 = vld [vmem:[%s166 + $0x2c] sm:$0xf]
      %v187 = vld [vmem:[%s166 + $0x30] sm:$0xf]
      %v188 = vld [vmem:[%s166 + $0x34] sm:$0xf]
      %v189 = vld [vmem:[%s166 + $0x38] sm:$0xf]
      %v190 = vld [vmem:[%s166 + $0x3c] sm:$0xf]
      %v191 = vld [vmem:[%s166 + $0x40] sm:$0xf]
      %v192 = vld [vmem:[%s166 + $0x44] sm:$0xf]
      %v193 = vld [vmem:[%s166 + $0x48] sm:$0xf]
      %v194 = vld [vmem:[%s166 + $0x4c] sm:$0xf]
      %v195 = vld [vmem:[%s166 + $0x50] sm:$0xf]
      %v196 = vld [vmem:[%s166 + $0x54] sm:$0xf]
      %v197 = vld [vmem:[%s166 + $0x58] sm:$0xf]
      %v198 = vld [vmem:[%s166 + $0x5c] sm:$0xf]
      %v199 = vld [vmem:[%s166 + $0x60] sm:$0xf]
      %v200 = vld [vmem:[%s166 + $0x64] sm:$0xf]
      %v201 = vld [vmem:[%s166 + $0x68] sm:$0xf]
      %v202 = vld [vmem:[%s166 + $0x6c] sm:$0xf]
      %v203 = vld [vmem:[%s166 + $0x70] sm:$0xf]
      %v204 = vld [vmem:[%s166 + $0x74] sm:$0xf]
      %v205 = vld [vmem:[%s166 + $0x78] sm:$0xf]
      %v206 = vld [vmem:[%s166 + $0x7c] sm:$0xf]
      %v207 = vld [vmem:[%s1] sm:$0xf]
      %v208 = vld [vmem:[%s1 + $0x4] sm:$0xf]
      %v209 = vld [vmem:[%s1 + $0x8] sm:$0xf]
      %v210 = vld [vmem:[%s1 + $0xc] sm:$0xf]
      %v211 = vld [vmem:[%s1 + $0x10] sm:$0xf]
      %v212 = vld [vmem:[%s1 + $0x14] sm:$0xf]
      %v213 = vld [vmem:[%s1 + $0x18] sm:$0xf]
      %v214 = vld [vmem:[%s1 + $0x1c] sm:$0xf]
      %v215 = vld [vmem:[%s1 + $0x20] sm:$0xf]
      %v216 = vld [vmem:[%s1 + $0x24] sm:$0xf]
      %v217 = vld [vmem:[%s1 + $0x28] sm:$0xf]
      %v218 = vld [vmem:[%s1 + $0x2c] sm:$0xf]
      %v219 = vld [vmem:[%s1 + $0x30] sm:$0xf]
      %v220 = vld [vmem:[%s1 + $0x34] sm:$0xf]
      %v221 = vld [vmem:[%s1 + $0x38] sm:$0xf]
      %v222 = vld [vmem:[%s1 + $0x3c] sm:$0xf]
      %v223 = vld [vmem:[%s2] sm:$0x1]
      %v225 = vlaneseq
      %v226 = vshrl.u32 %v225, 7
      %v227 = vsub.s32 0, %v226
      %v228 = vrot.slane %v223, %v227
      %v262 = vunpack.c.l.b16 %v175
      %v263 = vunpack.c.l.b16 %v176
      %v264 = vunpack.c.l.b16 %v177
      %v265 = vunpack.c.l.b16 %v178
      %v266 = vunpack.c.l.b16 %v179
      %v267 = vunpack.c.l.b16 %v180
      %v268 = vunpack.c.l.b16 %v181
      %v269 = vunpack.c.l.b16 %v182
      %v270 = vunpack.c.l.b16 %v183
      %v271 = vunpack.c.l.b16 %v184
      %v272 = vunpack.c.l.b16 %v185
      %v273 = vunpack.c.l.b16 %v186
      %v274 = vunpack.c.l.b16 %v187
      %v275 = vunpack.c.l.b16 %v188
      %v276 = vunpack.c.l.b16 %v189
      %v277 = vunpack.c.l.b16 %v190
      %v278 = vunpack.c.l.b16 %v191
      %v279 = vunpack.c.l.b16 %v192
      %v280 = vunpack.c.l.b16 %v193
      %v281 = vunpack.c.l.b16 %v194
      %v282 = vunpack.c.l.b16 %v195
      %v283 = vunpack.c.l.b16 %v196
      %v284 = vunpack.c.l.b16 %v197
      %v285 = vunpack.c.l.b16 %v198
      %v286 = vunpack.c.l.b16 %v199
      %v287 = vunpack.c.l.b16 %v200
      %v288 = vunpack.c.l.b16 %v201
      %v289 = vunpack.c.l.b16 %v202
      %v290 = vunpack.c.l.b16 %v203
      %v291 = vunpack.c.l.b16 %v204
      %v292 = vunpack.c.l.b16 %v205
      %v293 = vunpack.c.l.b16 %v206
      %v294 = vpack.c.b16 %v263, %v262
      %v295 = vpack.c.b16 %v265, %v264
      %v296 = vpack.c.b16 %v267, %v266
      %v297 = vpack.c.b16 %v269, %v268
      %v298 = vpack.c.b16 %v271, %v270
      %v299 = vpack.c.b16 %v273, %v272
      %v300 = vpack.c.b16 %v275, %v274
      %v301 = vpack.c.b16 %v277, %v276
      %v302 = vpack.c.b16 %v279, %v278
      %v303 = vpack.c.b16 %v281, %v280
      %v304 = vpack.c.b16 %v283, %v282
      %v305 = vpack.c.b16 %v285, %v284
      %v306 = vpack.c.b16 %v287, %v286
      %v307 = vpack.c.b16 %v289, %v288
      %v308 = vpack.c.b16 %v291, %v290
      %v309 = vpack.c.b16 %v293, %v292
      %v342 = vunpack.c.l.b16 %v207
      %v343 = vunpack.c.l.b16 %v208
      %v344 = vunpack.c.l.b16 %v209
      %v345 = vunpack.c.l.b16 %v210
      %v346 = vunpack.c.l.b16 %v211
      %v347 = vunpack.c.l.b16 %v212
      %v348 = vunpack.c.l.b16 %v213
      %v349 = vunpack.c.l.b16 %v214
      %v350 = vunpack.c.l.b16 %v215
      %v351 = vunpack.c.l.b16 %v216
      %v352 = vunpack.c.l.b16 %v217
      %v353 = vunpack.c.l.b16 %v218
      %v354 = vunpack.c.l.b16 %v219
      %v355 = vunpack.c.l.b16 %v220
      %v356 = vunpack.c.l.b16 %v221
      %v357 = vunpack.c.l.b16 %v222
      %v358 = vpack.c.b16 %v343, %v342
      %v359 = vpack.c.b16 %v345, %v344
      %v360 = vpack.c.b16 %v347, %v346
      %v361 = vpack.c.b16 %v349, %v348
      %v362 = vpack.c.b16 %v351, %v350
      %v363 = vpack.c.b16 %v353, %v352
      %v364 = vpack.c.b16 %v355, %v354
      %v365 = vpack.c.b16 %v357, %v356
      %374 = vmatprep.subr.bf16.mxu0 0
      %375 = vmatpush1.bf16.msra.mxu0 %v358
      %376 = vmatprep.subr.bf16.mxu0 0
      %377 = vmatpush1.bf16.msra.mxu0 %v359
      %378 = vmatprep.subr.bf16.mxu0 0
      %379 = vmatpush1.bf16.msra.mxu0 %v360
      %380 = vmatprep.subr.bf16.mxu0 0
      %381 = vmatpush1.bf16.msra.mxu0 %v361
      %382 = vmatprep.subr.bf16.mxu0 0
      %383 = vmatpush1.bf16.msra.mxu0 %v362
      %384 = vmatprep.subr.bf16.mxu0 0
      %385 = vmatpush1.bf16.msra.mxu0 %v363
      %386 = vmatprep.subr.bf16.mxu0 0
      %387 = vmatpush1.bf16.msra.mxu0 %v364
      %388 = vmatprep.subr.bf16.mxu0 0
      %389 = vmatpush1.bf16.msra.mxu0 %v365
      %390 = vmatprep.subr.bf16.mxu0 0
      %391 = vmatpush1.bf16.msra.mxu0 0
      %392 = vmatprep.subr.bf16.mxu0 0
      %393 = vmatpush1.bf16.msra.mxu0 0
      %394 = vmatprep.subr.bf16.mxu0 0
      %395 = vmatpush1.bf16.msra.mxu0 0
      %396 = vmatprep.subr.bf16.mxu0 0
      %397 = vmatpush1.bf16.msra.mxu0 0
      %398 = vmatprep.subr.bf16.mxu0 0
      %399 = vmatpush1.bf16.msra.mxu0 0
      %400 = vmatprep.subr.bf16.mxu0 0
      %401 = vmatpush1.bf16.msra.mxu0 0
      %402 = vmatprep.subr.bf16.mxu0 0
      %403 = vmatpush1.bf16.msra.mxu0 0
      %404 = vmatprep.subr.bf16.mxu0 0
      %405 = vmatpush1.bf16.msra.mxu0 0
      %406 = vmatprep.mubr.bf16.mxu0 0
      %407 = vmatmul.mubr.bf16.gmra.mrb[0].mxu0 %v294
      %v408 = vpop.f32.mrb[0].mxu0
      %v409 = vadd.f32 %v228, %v408
      %v410 = vpop.f32.mrb[0].mxu0
      %v411 = vpop.f32.mrb[0].mxu0
      %v412 = vadd.f32 %v228, %v411
      %v413 = vpop.f32.mrb[0].mxu0
      %414 = vmatprep.mubr.bf16.mxu0 0
      %415 = vmatmul.mubr.bf16.gmra.mrb[0].mxu0 %v295
      %v416 = vpop.f32.mrb[0].mxu0
      %v417 = vadd.f32 %v228, %v416
      %v418 = vpop.f32.mrb[0].mxu0
      %v419 = vpop.f32.mrb[0].mxu0
      %v420 = vadd.f32 %v228, %v419
      %v421 = vpop.f32.mrb[0].mxu0
      %422 = vmatprep.mubr.bf16.mxu0 0
      %423 = vmatmul.mubr.bf16.gmra.mrb[0].mxu0 %v296
      %v424 = vpop.f32.mrb[0].mxu0
      %v425 = vadd.f32 %v228, %v424
      %v426 = vpop.f32.mrb[0].mxu0
      %v427 = vpop.f32.mrb[0].mxu0
      %v428 = vadd.f32 %v228, %v427
      %v429 = vpop.f32.mrb[0].mxu0
      %430 = vmatprep.mubr.bf16.mxu0 0
      %431 = vmatmul.mubr.bf16.gmra.mrb[0].mxu0 %v297
      %v432 = vpop.f32.mrb[0].mxu0
      %v433 = vadd.f32 %v228, %v432
      %v434 = vpop.f32.mrb[0].mxu0
      %v435 = vpop.f32.mrb[0].mxu0
      %v436 = vadd.f32 %v228, %v435
      %v437 = vpop.f32.mrb[0].mxu0
      %438 = vmatprep.mubr.bf16.mxu0 0
      %439 = vmatmul.mubr.bf16.gmra.mrb[0].mxu0 %v298
      %v440 = vpop.f32.mrb[0].mxu0
      %v441 = vadd.f32 %v228, %v440
      %v442 = vpop.f32.mrb[0].mxu0
      %v443 = vpop.f32.mrb[0].mxu0
      %v444 = vadd.f32 %v228, %v443
      %v445 = vpop.f32.mrb[0].mxu0
      %446 = vmatprep.mubr.bf16.mxu0 0
      %447 = vmatmul.mubr.bf16.gmra.mrb[0].mxu0 %v299
      %v448 = vpop.f32.mrb[0].mxu0
      %v449 = vadd.f32 %v228, %v448
      %v450 = vpop.f32.mrb[0].mxu0
      %v451 = vpop.f32.mrb[0].mxu0
      %v452 = vadd.f32 %v228, %v451
      %v453 = vpop.f32.mrb[0].mxu0
      %454 = vmatprep.mubr.bf16.mxu0 0
      %455 = vmatmul.mubr.bf16.gmra.mrb[0].mxu0 %v300
      %v456 = vpop.f32.mrb[0].mxu0
      %v457 = vadd.f32 %v228, %v456
      %v458 = vpop.f32.mrb[0].mxu0
      %v459 = vpop.f32.mrb[0].mxu0
      %v460 = vadd.f32 %v228, %v459
      %v461 = vpop.f32.mrb[0].mxu0
      %462 = vmatprep.mubr.bf16.mxu0 0
      %463 = vmatmul.mubr.bf16.gmra.mrb[0].mxu0 %v301
      %v464 = vpop.f32.mrb[0].mxu0
      %v465 = vadd.f32 %v228, %v464
      %v466 = vpop.f32.mrb[0].mxu0
      %v467 = vpop.f32.mrb[0].mxu0
      %v468 = vadd.f32 %v228, %v467
      %v469 = vpop.f32.mrb[0].mxu0
      %470 = vmatprep.mubr.bf16.mxu0 0
      %471 = vmatmul.mubr.bf16.gmra.mrb[0].mxu0 %v302
      %v472 = vpop.f32.mrb[0].mxu0
      %v473 = vadd.f32 %v228, %v472
      %v474 = vpop.f32.mrb[0].mxu0
      %v475 = vpop.f32.mrb[0].mxu0
      %v476 = vadd.f32 %v228, %v475
      %v477 = vpop.f32.mrb[0].mxu0
      %478 = vmatprep.mubr.bf16.mxu0 0
      %479 = vmatmul.mubr.bf16.gmra.mrb[0].mxu0 %v303
      %v480 = vpop.f32.mrb[0].mxu0
      %v481 = vadd.f32 %v228, %v480
      %v482 = vpop.f32.mrb[0].mxu0
      %v483 = vpop.f32.mrb[0].mxu0
      %v484 = vadd.f32 %v228, %v483
      %v485 = vpop.f32.mrb[0].mxu0
      %486 = vmatprep.mubr.bf16.mxu0 0
      %487 = vmatmul.mubr.bf16.gmra.mrb[0].mxu0 %v304
      %v488 = vpop.f32.mrb[0].mxu0
      %v489 = vadd.f32 %v228, %v488
      %v490 = vpop.f32.mrb[0].mxu0
      %v491 = vpop.f32.mrb[0].mxu0
      %v492 = vadd.f32 %v228, %v491
      %v493 = vpop.f32.mrb[0].mxu0
      %494 = vmatprep.mubr.bf16.mxu0 0
      %495 = vmatmul.mubr.bf16.gmra.mrb[0].mxu0 %v305
      %v496 = vpop.f32.mrb[0].mxu0
      %v497 = vadd.f32 %v228, %v496
      %v498 = vpop.f32.mrb[0].mxu0
      %v499 = vpop.f32.mrb[0].mxu0
      %v500 = vadd.f32 %v228, %v499
      %v501 = vpop.f32.mrb[0].mxu0
      %502 = vmatprep.mubr.bf16.mxu0 0
      %503 = vmatmul.mubr.bf16.gmra.mrb[0].mxu0 %v306
      %v504 = vpop.f32.mrb[0].mxu0
      %v505 = vadd.f32 %v228, %v504
      %v506 = vpop.f32.mrb[0].mxu0
      %v507 = vpop.f32.mrb[0].mxu0
      %v508 = vadd.f32 %v228, %v507
      %v509 = vpop.f32.mrb[0].mxu0
      %510 = vmatprep.mubr.bf16.mxu0 0
      %511 = vmatmul.mubr.bf16.gmra.mrb[0].mxu0 %v307
      %v512 = vpop.f32.mrb[0].mxu0
      %v513 = vadd.f32 %v228, %v512
      %v514 = vpop.f32.mrb[0].mxu0
      %v515 = vpop.f32.mrb[0].mxu0
      %v516 = vadd.f32 %v228, %v515
      %v517 = vpop.f32.mrb[0].mxu0
      %518 = vmatprep.mubr.bf16.mxu0 0
      %519 = vmatmul.mubr.bf16.gmra.mrb[0].mxu0 %v308
      %v520 = vpop.f32.mrb[0].mxu0
      %v521 = vadd.f32 %v228, %v520
      %v522 = vpop.f32.mrb[0].mxu0
      %v523 = vpop.f32.mrb[0].mxu0
      %v524 = vadd.f32 %v228, %v523
      %v525 = vpop.f32.mrb[0].mxu0
      %526 = vmatprep.mubr.bf16.mxu0 0
      %527 = vmatmul.mubr.bf16.gmra.mrb[0].mxu0 %v309
      %v528 = vpop.f32.mrb[0].mxu0
      %v529 = vadd.f32 %v228, %v528
      %v530 = vpop.f32.mrb[0].mxu0
      %v531 = vpop.f32.mrb[0].mxu0
      %v532 = vadd.f32 %v228, %v531
      %v533 = vpop.f32.mrb[0].mxu0
      %534 = vdwg.mxu0
      %vm535 = vcmp.ge.f32.partialorder %v409, 0.0
      %vm536 = vcmp.ge.f32.partialorder %v412, 0.0
      %vm537 = vcmp.ge.f32.partialorder %v417, 0.0
      %vm538 = vcmp.ge.f32.partialorder %v420, 0.0
      %vm539 = vcmp.ge.f32.partialorder %v425, 0.0
      %vm540 = vcmp.ge.f32.partialorder %v428, 0.0
      %vm541 = vcmp.ge.f32.partialorder %v433, 0.0
      %vm542 = vcmp.ge.f32.partialorder %v436, 0.0
      %vm543 = vcmp.ge.f32.partialorder %v441, 0.0
      %vm544 = vcmp.ge.f32.partialorder %v444, 0.0
      %vm545 = vcmp.ge.f32.partialorder %v449, 0.0
      %vm546 = vcmp.ge.f32.partialorder %v452, 0.0
      %vm547 = vcmp.ge.f32.partialorder %v457, 0.0
      %vm548 = vcmp.ge.f32.partialorder %v460, 0.0
      %vm549 = vcmp.ge.f32.partialorder %v465, 0.0
      %vm550 = vcmp.ge.f32.partialorder %v468, 0.0
      %vm551 = vcmp.ge.f32.partialorder %v473, 0.0
      %vm552 = vcmp.ge.f32.partialorder %v476, 0.0
      %vm553 = vcmp.ge.f32.partialorder %v481, 0.0
      %vm554 = vcmp.ge.f32.partialorder %v484, 0.0
      %vm555 = vcmp.ge.f32.partialorder %v489, 0.0
      %vm556 = vcmp.ge.f32.partialorder %v492, 0.0
      %vm557 = vcmp.ge.f32.partialorder %v497, 0.0
      %vm558 = vcmp.ge.f32.partialorder %v500, 0.0
      %vm559 = vcmp.ge.f32.partialorder %v505, 0.0
      %vm560 = vcmp.ge.f32.partialorder %v508, 0.0
      %vm561 = vcmp.ge.f32.partialorder %v513, 0.0
      %vm562 = vcmp.ge.f32.partialorder %v516, 0.0
      %vm563 = vcmp.ge.f32.partialorder %v521, 0.0
      %vm564 = vcmp.ge.f32.partialorder %v524, 0.0
      %vm565 = vcmp.ge.f32.partialorder %v529, 0.0
      %vm566 = vcmp.ge.f32.partialorder %v532, 0.0
      %v567 = vmul.f32 %v409, 0.2
      %v568 = vmul.f32 %v412, 0.2
      %v569 = vmul.f32 %v417, 0.2
      %v570 = vmul.f32 %v420, 0.2
      %v571 = vmul.f32 %v425, 0.2
      %v572 = vmul.f32 %v428, 0.2
      %v573 = vmul.f32 %v433, 0.2
      %v574 = vmul.f32 %v436, 0.2
      %v575 = vmul.f32 %v441, 0.2
      %v576 = vmul.f32 %v444, 0.2
      %v577 = vmul.f32 %v449, 0.2
      %v578 = vmul.f32 %v452, 0.2
      %v579 = vmul.f32 %v457, 0.2
      %v580 = vmul.f32 %v460, 0.2
      %v581 = vmul.f32 %v465, 0.2
      %v582 = vmul.f32 %v468, 0.2
      %v583 = vmul.f32 %v473, 0.2
      %v584 = vmul.f32 %v476, 0.2
      %v585 = vmul.f32 %v481, 0.2
      %v586 = vmul.f32 %v484, 0.2
      %v587 = vmul.f32 %v489, 0.2
      %v588 = vmul.f32 %v492, 0.2
      %v589 = vmul.f32 %v497, 0.2
      %v590 = vmul.f32 %v500, 0.2
      %v591 = vmul.f32 %v505, 0.2
      %v592 = vmul.f32 %v508, 0.2
      %v593 = vmul.f32 %v513, 0.2
      %v594 = vmul.f32 %v516, 0.2
      %v595 = vmul.f32 %v521, 0.2
      %v596 = vmul.f32 %v524, 0.2
      %v597 = vmul.f32 %v529, 0.2
      %v598 = vmul.f32 %v532, 0.2
      %v599 = vsel %vm535, %v409, %v567
      %v600 = vsel %vm536, %v412, %v568
      %v601 = vsel %vm537, %v417, %v569
      %v602 = vsel %vm538, %v420, %v570
      %v603 = vsel %vm539, %v425, %v571
      %v604 = vsel %vm540, %v428, %v572
      %v605 = vsel %vm541, %v433, %v573
      %v606 = vsel %vm542, %v436, %v574
      %v607 = vsel %vm543, %v441, %v575
      %v608 = vsel %vm544, %v444, %v576
      %v609 = vsel %vm545, %v449, %v577
      %v610 = vsel %vm546, %v452, %v578
      %v611 = vsel %vm547, %v457, %v579
      %v612 = vsel %vm548, %v460, %v580
      %v613 = vsel %vm549, %v465, %v581
      %v614 = vsel %vm550, %v468, %v582
      %v615 = vsel %vm551, %v473, %v583
      %v616 = vsel %vm552, %v476, %v584
      %v617 = vsel %vm553, %v481, %v585
      %v618 = vsel %vm554, %v484, %v586
      %v619 = vsel %vm555, %v489, %v587
      %v620 = vsel %vm556, %v492, %v588
      %v621 = vsel %vm557, %v497, %v589
      %v622 = vsel %vm558, %v500, %v590
      %v623 = vsel %vm559, %v505, %v591
      %v624 = vsel %vm560, %v508, %v592
      %v625 = vsel %vm561, %v513, %v593
      %v626 = vsel %vm562, %v516, %v594
      %v627 = vsel %vm563, %v521, %v595
      %v628 = vsel %vm564, %v524, %v596
      %v629 = vsel %vm565, %v529, %v597
      %v630 = vsel %vm566, %v532, %v598
      %v631 = vpack.c.bf16 %v600, %v599
      %v632 = vpack.c.bf16 %v602, %v601
      %v633 = vpack.c.bf16 %v604, %v603
      %v634 = vpack.c.bf16 %v606, %v605
      %v635 = vpack.c.bf16 %v608, %v607
      %v636 = vpack.c.bf16 %v610, %v609
      %v637 = vpack.c.bf16 %v612, %v611
      %v638 = vpack.c.bf16 %v614, %v613
      %v639 = vpack.c.bf16 %v616, %v615
      %v640 = vpack.c.bf16 %v618, %v617
      %v641 = vpack.c.bf16 %v620, %v619
      %v642 = vpack.c.bf16 %v622, %v621
      %v643 = vpack.c.bf16 %v624, %v623
      %v644 = vpack.c.bf16 %v626, %v625
      %v645 = vpack.c.bf16 %v628, %v627
      %v646 = vpack.c.bf16 %v630, %v629
      %v663 = vunpack.c.l.b16 %v631
      %v664 = vunpack.c.h.b16 %v631
      %v665 = vunpack.c.l.b16 %v632
      %v666 = vunpack.c.h.b16 %v632
      %v667 = vunpack.c.l.b16 %v633
      %v668 = vunpack.c.h.b16 %v633
      %v669 = vunpack.c.l.b16 %v634
      %v670 = vunpack.c.h.b16 %v634
      %v671 = vunpack.c.l.b16 %v635
      %v672 = vunpack.c.h.b16 %v635
      %v673 = vunpack.c.l.b16 %v636
      %v674 = vunpack.c.h.b16 %v636
      %v675 = vunpack.c.l.b16 %v637
      %v676 = vunpack.c.h.b16 %v637
      %v677 = vunpack.c.l.b16 %v638
      %v678 = vunpack.c.h.b16 %v638
      %v679 = vunpack.c.l.b16 %v639
      %v680 = vunpack.c.h.b16 %v639
      %v681 = vunpack.c.l.b16 %v640
      %v682 = vunpack.c.h.b16 %v640
      %v683 = vunpack.c.l.b16 %v641
      %v684 = vunpack.c.h.b16 %v641
      %v685 = vunpack.c.l.b16 %v642
      %v686 = vunpack.c.h.b16 %v642
      %v687 = vunpack.c.l.b16 %v643
      %v688 = vunpack.c.h.b16 %v643
      %v689 = vunpack.c.l.b16 %v644
      %v690 = vunpack.c.h.b16 %v644
      %v691 = vunpack.c.l.b16 %v645
      %v692 = vunpack.c.h.b16 %v645
      %v693 = vunpack.c.l.b16 %v646
      %v694 = vunpack.c.h.b16 %v646
      %v695 = vpack.c.b16 %v663, %v663
      %v696 = vpack.c.b16 %v664, %v664
      %v697 = vpack.c.b16 %v665, %v665
      %v698 = vpack.c.b16 %v666, %v666
      %v699 = vpack.c.b16 %v667, %v667
      %v700 = vpack.c.b16 %v668, %v668
      %v701 = vpack.c.b16 %v669, %v669
      %v702 = vpack.c.b16 %v670, %v670
      %v703 = vpack.c.b16 %v671, %v671
      %v704 = vpack.c.b16 %v672, %v672
      %v705 = vpack.c.b16 %v673, %v673
      %v706 = vpack.c.b16 %v674, %v674
      %v707 = vpack.c.b16 %v675, %v675
      %v708 = vpack.c.b16 %v676, %v676
      %v709 = vpack.c.b16 %v677, %v677
      %v710 = vpack.c.b16 %v678, %v678
      %v711 = vpack.c.b16 %v679, %v679
      %v712 = vpack.c.b16 %v680, %v680
      %v713 = vpack.c.b16 %v681, %v681
      %v714 = vpack.c.b16 %v682, %v682
      %v715 = vpack.c.b16 %v683, %v683
      %v716 = vpack.c.b16 %v684, %v684
      %v717 = vpack.c.b16 %v685, %v685
      %v718 = vpack.c.b16 %v686, %v686
      %v719 = vpack.c.b16 %v687, %v687
      %v720 = vpack.c.b16 %v688, %v688
      %v721 = vpack.c.b16 %v689, %v689
      %v722 = vpack.c.b16 %v690, %v690
      %v723 = vpack.c.b16 %v691, %v691
      %v724 = vpack.c.b16 %v692, %v692
      %v725 = vpack.c.b16 %v693, %v693
      %v726 = vpack.c.b16 %v694, %v694
      %759 = vst [vmem:[%s172] sm:$0xf] %v695
      %760 = vst [vmem:[%s172 + $0x4] sm:$0xf] %v696
      %761 = vst [vmem:[%s172 + $0x8] sm:$0xf] %v697
      %762 = vst [vmem:[%s172 + $0xc] sm:$0xf] %v698
      %763 = vst [vmem:[%s172 + $0x10] sm:$0xf] %v699
      %764 = vst [vmem:[%s172 + $0x14] sm:$0xf] %v700
      %765 = vst [vmem:[%s172 + $0x18] sm:$0xf] %v701
      %766 = vst [vmem:[%s172 + $0x1c] sm:$0xf] %v702
      %767 = vst [vmem:[%s172 + $0x20] sm:$0xf] %v703
      %768 = vst [vmem:[%s172 + $0x24] sm:$0xf] %v704
      %769 = vst [vmem:[%s172 + $0x28] sm:$0xf] %v705
      %770 = vst [vmem:[%s172 + $0x2c] sm:$0xf] %v706
      %771 = vst [vmem:[%s172 + $0x30] sm:$0xf] %v707
      %772 = vst [vmem:[%s172 + $0x34] sm:$0xf] %v708
      %773 = vst [vmem:[%s172 + $0x38] sm:$0xf] %v709
      %774 = vst [vmem:[%s172 + $0x3c] sm:$0xf] %v710
      %775 = vst [vmem:[%s172 + $0x40] sm:$0xf] %v711
      %776 = vst [vmem:[%s172 + $0x44] sm:$0xf] %v712
      %777 = vst [vmem:[%s172 + $0x48] sm:$0xf] %v713
      %778 = vst [vmem:[%s172 + $0x4c] sm:$0xf] %v714
      %779 = vst [vmem:[%s172 + $0x50] sm:$0xf] %v715
      %780 = vst [vmem:[%s172 + $0x54] sm:$0xf] %v716
      %781 = vst [vmem:[%s172 + $0x58] sm:$0xf] %v717
      %782 = vst [vmem:[%s172 + $0x5c] sm:$0xf] %v718
      %783 = vst [vmem:[%s172 + $0x60] sm:$0xf] %v719
      %784 = vst [vmem:[%s172 + $0x64] sm:$0xf] %v720
      %785 = vst [vmem:[%s172 + $0x68] sm:$0xf] %v721
      %786 = vst [vmem:[%s172 + $0x6c] sm:$0xf] %v722
      %787 = vst [vmem:[%s172 + $0x70] sm:$0xf] %v723
      %788 = vst [vmem:[%s172 + $0x74] sm:$0xf] %v724
      %789 = vst [vmem:[%s172 + $0x78] sm:$0xf] %v725
      %790 = vst [vmem:[%s172 + $0x7c] sm:$0xf] %v726
      %s791 = smul.u32 32, %s14
      %p792 = scmp.lt.s32.totalorder %s791, 63
      %s793 = scalar_select %p792, %s791, 63
      %s794 = smul.addr %s793, 4
      %s795 = scalar_lea.vmem %s3, %s794
      // Predicated region
      $region33: #{discriminator_forward.4} parent=31 // pred_check
        %p796 = pneg %p100
      $region34: #{discriminator_forward.4} parent=31 // pred_check_branch
        %798 = sbr.rel (%p796) target = $region36
      $region35: #{discriminator_forward.4} parent=31 // pred_region
        %s799 = smul.u32 32, %s14
      $region36: #{discriminator_forward.4} parent=31 // pred_fallthru
        _
    $region32: #{discriminator_forward.4} parent=5 // pred_fallthru
      _
    %p800 = scmp.le.s32.totalorder 2, %s9
    // Predicated region
    $region37: #{discriminator_forward.4} parent=5 // pred_check
      %p801 = pneg %p800
    $region38: #{discriminator_forward.4} parent=5 // pred_check_branch
      %803 = sbr.rel (%p801) target = $region40
    $region39: #{discriminator_forward.4} parent=5 // pred_region
      %s804 = ssub.s32 %s9, 2
      // Predicated region
      $region41: #{discriminator_forward.4} parent=39 // pred_check
        %p805 = pneg %p106
      $region42: #{discriminator_forward.4} parent=39 // pred_check_branch
        %807 = sbr.rel (%p805) target = $region44
      $region43: #{discriminator_forward.4} parent=39 // pred_region
        %s808 = smul.u32 32, %s15
        %p809 = scmp.lt.s32.totalorder %s808, 63
        %s810 = scalar_select %p809, %s808, 63
        %s811 = smul.addr %s810, 4
        %s812 = scalar_lea.vmem %s3, %s811
      $region44: #{discriminator_forward.4} parent=39 // pred_fallthru
        _
    $region40: #{discriminator_forward.4} parent=5 // pred_fallthru
      _
  $region6: #{discriminator_forward.4} parent=0 // loop_footer
    %s13 = sadd.s32 1, %s9
  $region7: #{discriminator_forward.4} parent=0 // loop_footer_branch
    %8 = sbr.rel target = $region3
  $region8: #{discriminator_forward.4} parent=0 // loop_exit
    _

// kernel: discriminator_forward.5
$region0: #{discriminator_forward.5}
  #allocation0 [shape = 'u32[]', space=smem, size = 0x4, offset = 0x4, fixed_abs, tag = 'smem constant byte address 0x4 - core index']
  #allocation1 [shape = 'u32[144,128]{1,0:T(1,128)}', space=vmem, size = 0x12000, scoped, tag = 'internal scratch']
  %s0 = inlined_call_operand.vmem [shape: bf16[128,128], index: 0, kind: input, shape index: {}]
  %s1 = inlined_call_operand.vmem [shape: bf16[128,128], index: 1, kind: input, shape index: {}]
  %s2 = inlined_call_operand.vmem [shape: f32[128,128], index: 2, kind: output, shape index: {0}]
  %s3 = inlined_call_operand.vmem [shape: f32[2,2,128], index: 3, kind: output, shape index: {1}]
  %4 = xla_tuple %s2, %s3
  %s5 = sld [smem:[#allocation0]]
  $region49: #{discriminator_forward.5} parent=0
    _
  %s7 = ssub.s32 1, %s5
  %s8 = scalar_select 0, %s7, %s5
  loop: start=0, step=1, limit=4
  $region2: #{discriminator_forward.5} parent=0 // loop_pre_header
    _
  $region3: #{discriminator_forward.5} parent=0 // loop_header
    %s10 = sphi 0, %s14
    %p11 = scmp.ge.s32.totalorder %s10, 4
    %s20 = sphi 0, %s22
    %s23 = sphi 0, %s20
    %s24 = sphi 0, %s23
    %s40 = sphi 0, %s24
    %s44 = sphi 0, %s44
    %s46 = sphi 0, %s44
    %s47 = sphi 0, %s46
    %s61 = sphi 0, %s47
    %s67 = sphi 0, %s69
    %s70 = sphi 0, %s67
    %s71 = sphi 0, %s70
    %s87 = sphi 0, %s71
    %s93 = sphi 0, %s95
    %s96 = sphi 0, %s93
    %s97 = sphi 0, %s96
    %s113 = sphi 0, %s97
  $region4: #{discriminator_forward.5} parent=0 // loop_header_branch
    %13 = sbr.rel (%p11) target = $region8
  $region5: #{discriminator_forward.5} parent=0 // loop_body
    %s15 = ssub.s32 %s10, 1
    %s16 = ssub.s32 %s10, 2
    %s17 = sadd.s32 %s10, 1
    %s18 = ssub.s32 %s10, %s17
    %p19 = scmp.eq.s32.totalorder %s18, 0
    %s21 = sadd.s32 %s20, 1
    %s22 = scalar_select %p19, %s20, %s21
    %p25 = pneg %p19
    %p26 = scmp.eq.s32.totalorder %s10, 1
    %p27 = por %p25, %p26
    %p28 = scmp.ne.s32.totalorder %s20, %s23
    %p29 = scmp.eq.s32.totalorder %s10, 0
    %p30 = por %p28, %p29
    %p31 = scmp.ne.s32.totalorder %s20, %s23
    %p32 = scmp.eq.s32.totalorder %s15, 1
    %p33 = por %p31, %p32
    %p34 = scmp.ne.s32.totalorder %s23, %s24
    %p35 = scmp.eq.s32.totalorder %s15, 0
    %p36 = por %p34, %p35
    %p37 = scmp.ne.s32.totalorder %s23, %s24
    %p38 = scmp.eq.s32.totalorder %s16, 1
    %p39 = por %p37, %p38
    %p41 = scmp.ne.s32.totalorder %s24, %s40
    %p42 = scmp.eq.s32.totalorder %s16, 0
    %p43 = por %p41, %p42
    %s45 = sadd.s32 %s44, 1
    %p48 = scmp.eq.s32.totalorder %s10, 1
    %p49 = scmp.ne.s32.totalorder %s44, %s46
    %p50 = scmp.eq.s32.totalorder %s10, 0
    %p51 = por %p49, %p50
    %p52 = scmp.ne.s32.totalorder %s44, %s46
    %p53 = scmp.eq.s32.totalorder %s15, 1
    %p54 = por %p52, %p53
    %p55 = scmp.ne.s32.totalorder %s46, %s47
    %p56 = scmp.eq.s32.totalorder %s15, 0
    %p57 = por %p55, %p56
    %p58 = scmp.ne.s32.totalorder %s46, %s47
    %p59 = scmp.eq.s32.totalorder %s16, 1
    %p60 = por %p58, %p59
    %p62 = scmp.ne.s32.totalorder %s47, %s61
    %p63 = scmp.eq.s32.totalorder %s16, 0
    %p64 = por %p62, %p63
    %s65 = ssub.s32 %s10, %s17
    %p66 = scmp.eq.s32.totalorder %s65, 0
    %s68 = sadd.s32 %s67, 1
    %s69 = scalar_select %p66, %s67, %s68
    %p72 = pneg %p66
    %p73 = scmp.eq.s32.totalorder %s10, 1
    %p74 = por %p72, %p73
    %p75 = scmp.ne.s32.totalorder %s67, %s70
    %p76 = scmp.eq.s32.totalorder %s10, 0
    %p77 = por %p75, %p76
    %p78 = scmp.ne.s32.totalorder %s67, %s70
    %p79 = scmp.eq.s32.totalorder %s15, 1
    %p80 = por %p78, %p79
    %p81 = scmp.ne.s32.totalorder %s70, %s71
    %p82 = scmp.eq.s32.totalorder %s15, 0
    %p83 = por %p81, %p82
    %p84 = scmp.ne.s32.totalorder %s70, %s71
    %p85 = scmp.eq.s32.totalorder %s16, 1
    %p86 = por %p84, %p85
    %p88 = scmp.ne.s32.totalorder %s71, %s87
    %p89 = scmp.eq.s32.totalorder %s16, 0
    %p90 = por %p88, %p89
    %s91 = ssub.s32 %s10, %s17
    %p92 = scmp.eq.s32.totalorder %s91, 0
    %s94 = sadd.s32 %s93, 1
    %s95 = scalar_select %p92, %s93, %s94
    %p98 = pneg %p92
    %p99 = scmp.eq.s32.totalorder %s10, 1
    %p100 = por %p98, %p99
    %p101 = scmp.ne.s32.totalorder %s93, %s96
    %p102 = scmp.eq.s32.totalorder %s10, 0
    %p103 = por %p101, %p102
    %p104 = scmp.ne.s32.totalorder %s93, %s96
    %p105 = scmp.eq.s32.totalorder %s15, 1
    %p106 = por %p104, %p105
    %p107 = scmp.ne.s32.totalorder %s96, %s97
    %p108 = scmp.eq.s32.totalorder %s15, 0
    %p109 = por %p107, %p108
    %p110 = scmp.ne.s32.totalorder %s96, %s97
    %p111 = scmp.eq.s32.totalorder %s16, 1
    %p112 = por %p110, %p111
    %p114 = scmp.ne.s32.totalorder %s97, %s113
    %p115 = scmp.eq.s32.totalorder %s16, 0
    %p116 = por %p114, %p115
    %p117 = scmp.le.s32.totalorder 1, %s10
    %p118 = scmp.lt.s32.totalorder %s10, 3
    %p119 = pnand %p117, %p118
    %p120 = pneg %p119
    // Predicated region
    $region9: #{discriminator_forward.5} parent=5 // pred_check
      _
    $region10: #{discriminator_forward.5} parent=5 // pred_check_branch
      %122 = sbr.rel (%p119) target = $region12
    $region11: #{discriminator_forward.5} parent=5 // pred_region
      %s123 = ssub.s32 %s10, 1
      // Predicated region
      $region13: #{discriminator_forward.5} parent=11 // pred_check
        %p124 = pneg %p57
      $region14: #{discriminator_forward.5} parent=11 // pred_check_branch
        %126 = sbr.rel (%p124) target = $region16
      $region15: #{discriminator_forward.5} parent=11 // pred_region
        _
      $region16: #{discriminator_forward.5} parent=11 // pred_fallthru
        _
    $region12: #{discriminator_forward.5} parent=5 // pred_fallthru
      _
    %p127 = scmp.lt.s32.totalorder %s10, 2
    // Predicated region
    $region17: #{discriminator_forward.5} parent=5 // pred_check
      %p128 = pneg %p127
    $region18: #{discriminator_forward.5} parent=5 // pred_check_branch
      %130 = sbr.rel (%p128) target = $region20
    $region19: #{discriminator_forward.5} parent=5 // pred_region
      // Predicated region
      $region21: #{discriminator_forward.5} parent=19 // pred_check
        %p131 = pneg %p30
      $region22: #{discriminator_forward.5} parent=19 // pred_check_branch
        %133 = sbr.rel (%p131) target = $region24
      $region23: #{discriminator_forward.5} parent=19 // pred_region
        %s134 = smul.u32 8, %s10
        %p135 = scmp.lt.s32.totalorder %s134, 15
        %s136 = scalar_select %p135, %s134, 15
        %s137 = smul.addr %s136, 4
        %s138 = scalar_lea.vmem %s0, %s137
        %s139 = smul.u32 8, %s10
      $region24: #{discriminator_forward.5} parent=19 // pred_fallthru
        _
    $region20: #{discriminator_forward.5} parent=5 // pred_fallthru
      _
    %p140 = scmp.le.s32.totalorder 1, %s10
    %p141 = scmp.lt.s32.totalorder %s10, 3
    %p142 = pnand %p140, %p141
    %p143 = pneg %p142
    // Predicated region
    $region25: #{discriminator_forward.5} parent=5 // pred_check
      _
    $region26: #{discriminator_forward.5} parent=5 // pred_check_branch
      %145 = sbr.rel (%p142) target = $region28
    $region27: #{discriminator_forward.5} parent=5 // pred_region
      %s146 = ssub.s32 %s10, 1
      %s147 = smul.u32 8, %s15
      %p148 = scmp.lt.s32.totalorder %s147, 15
      %s149 = scalar_select %p148, %s147, 15
      %s150 = smul.addr %s149, 4
      %s151 = scalar_lea.vmem %s0, %s150
      %p152 = pneg %p36
      %p153 = pneg %p33
      %p154 = pneg %p57
      %p155 = pneg %p54
      %p156 = pneg %p83
      %p157 = pneg %p80
      %s158 = smul.u32 8, %s15
      %p159 = scmp.lt.s32.totalorder %s158, 15
      %s160 = scalar_select %p159, %s158, 15
      %s161 = smul.addr %s160, 8
      %s162 = scalar_lea.vmem %s2, %s161
      %p163 = pneg %p109
      %p164 = pneg %p106
      %p165 = scmp.lt.s32.totalorder %s15, 1
      %s166 = scalar_select %p165, %s15, 1
      %s167 = smul.addr %s166, 2
      %s168 = scalar_lea.vmem %s3, %s167
      %s169 = smul.u32 8, %s15
      %p170 = scmp.lt.s32.totalorder %s169, 15
      %s171 = scalar_select %p170, %s169, 15
      %s172 = smul.addr %s171, 4
      %s173 = scalar_lea.vmem %s0, %s172
      %s174 = smul.u32 8, %s15
      %s175 = smul.u32 8, %s15
      %p176 = scmp.lt.s32.totalorder %s175, 15
      %s177 = scalar_select %p176, %s175, 15
      %s178 = smul.addr %s177, 8
      %s179 = scalar_lea.vmem %s2, %s178
      %s180 = smul.u32 8, %s15
      %p181 = scmp.lt.s32.totalorder %s15, 1
      %s182 = scalar_select %p181, %s15, 1
      %s183 = smul.addr %s182, 2
      %s184 = scalar_lea.vmem %s3, %s183
      %v186 = vld [vmem:[%s173] sm:$0xf]
      %v187 = vld [vmem:[%s173 + $0x4] sm:$0xf]
      %v188 = vld [vmem:[%s173 + $0x8] sm:$0xf]
      %v189 = vld [vmem:[%s173 + $0xc] sm:$0xf]
      %v190 = vld [vmem:[%s173 + $0x10] sm:$0xf]
      %v191 = vld [vmem:[%s173 + $0x14] sm:$0xf]
      %v192 = vld [vmem:[%s173 + $0x18] sm:$0xf]
      %v193 = vld [vmem:[%s173 + $0x1c] sm:$0xf]
      %v194 = vld [vmem:[%s1] sm:$0xf]
      %v195 = vld [vmem:[%s1 + $0x4] sm:$0xf]
      %v196 = vld [vmem:[%s1 + $0x8] sm:$0xf]
      %v197 = vld [vmem:[%s1 + $0xc] sm:$0xf]
      %v198 = vld [vmem:[%s1 + $0x10] sm:$0xf]
      %v199 = vld [vmem:[%s1 + $0x14] sm:$0xf]
      %v200 = vld [vmem:[%s1 + $0x18] sm:$0xf]
      %v201 = vld [vmem:[%s1 + $0x1c] sm:$0xf]
      %v202 = vld [vmem:[%s1 + $0x20] sm:$0xf]
      %v203 = vld [vmem:[%s1 + $0x24] sm:$0xf]
      %v204 = vld [vmem:[%s1 + $0x28] sm:$0xf]
      %v205 = vld [vmem:[%s1 + $0x2c] sm:$0xf]
      %v206 = vld [vmem:[%s1 + $0x30] sm:$0xf]
      %v207 = vld [vmem:[%s1 + $0x34] sm:$0xf]
      %v208 = vld [vmem:[%s1 + $0x38] sm:$0xf]
      %v209 = vld [vmem:[%s1 + $0x3c] sm:$0xf]
      %v218 = vunpack.c.l.b16 %v186
      %v219 = vunpack.c.l.b16 %v187
      %v220 = vunpack.c.l.b16 %v188
      %v221 = vunpack.c.l.b16 %v189
      %v222 = vunpack.c.l.b16 %v190
      %v223 = vunpack.c.l.b16 %v191
      %v224 = vunpack.c.l.b16 %v192
      %v225 = vunpack.c.l.b16 %v193
      %v226 = vpack.c.b16 %v219, %v218
      %v227 = vpack.c.b16 %v221, %v220
      %v228 = vpack.c.b16 %v223, %v222
      %v229 = vpack.c.b16 %v225, %v224
      %v250 = vunpack.c.l.b16 %v194
      %v251 = vunpack.c.l.b16 %v195
      %v252 = vunpack.c.l.b16 %v196
      %v253 = vunpack.c.l.b16 %v197
      %v254 = vunpack.c.l.b16 %v198
      %v255 = vunpack.c.l.b16 %v199
      %v256 = vunpack.c.l.b16 %v200
      %v257 = vunpack.c.l.b16 %v201
      %v258 = vunpack.c.l.b16 %v202
      %v259 = vunpack.c.l.b16 %v203
      %v260 = vunpack.c.l.b16 %v204
      %v261 = vunpack.c.l.b16 %v205
      %v262 = vunpack.c.l.b16 %v206
      %v263 = vunpack.c.l.b16 %v207
      %v264 = vunpack.c.l.b16 %v208
      %v265 = vunpack.c.l.b16 %v209
      %v266 = vpack.c.b16 %v251, %v250
      %v267 = vpack.c.b16 %v253, %v252
      %v268 = vpack.c.b16 %v255, %v254
      %v269 = vpack.c.b16 %v257, %v256
      %v270 = vpack.c.b16 %v259, %v258
      %v271 = vpack.c.b16 %v261, %v260
      %v272 = vpack.c.b16 %v263, %v262
      %v273 = vpack.c.b16 %v265, %v264
      %282 = vmatprep.subr.bf16.mxu0 0
      %283 = vmatpush1.bf16.msra.mxu0 %v266
      %284 = vmatprep.subr.bf16.mxu0 0
      %285 = vmatpush1.bf16.msra.mxu0 %v267
      %286 = vmatprep.subr.bf16.mxu0 0
      %287 = vmatpush1.bf16.msra.mxu0 %v268
      %288 = vmatprep.subr.bf16.mxu0 0
      %289 = vmatpush1.bf16.msra.mxu0 %v269
      %290 = vmatprep.subr.bf16.mxu0 0
      %291 = vmatpush1.bf16.msra.mxu0 %v270
      %292 = vmatprep.subr.bf16.mxu0 0
      %293 = vmatpush1.bf16.msra.mxu0 %v271
      %294 = vmatprep.subr.bf16.mxu0 0
      %295 = vmatpush1.bf16.msra.mxu0 %v272
      %296 = vmatprep.subr.bf16.mxu0 0
      %297 = vmatpush1.bf16.msra.mxu0 %v273
      %298 = vmatprep.subr.bf16.mxu0 0
      %299 = vmatpush1.bf16.msra.mxu0 0
      %300 = vmatprep.subr.bf16.mxu0 0
      %301 = vmatpush1.bf16.msra.mxu0 0
      %302 = vmatprep.subr.bf16.mxu0 0
      %303 = vmatpush1.bf16.msra.mxu0 0
      %304 = vmatprep.subr.bf16.mxu0 0
      %305 = vmatpush1.bf16.msra.mxu0 0
      %306 = vmatprep.subr.bf16.mxu0 0
      %307 = vmatpush1.bf16.msra.mxu0 0
      %308 = vmatprep.subr.bf16.mxu0 0
      %309 = vmatpush1.bf16.msra.mxu0 0
      %310 = vmatprep.subr.bf16.mxu0 0
      %311 = vmatpush1.bf16.msra.mxu0 0
      %312 = vmatprep.subr.bf16.mxu0 0
      %313 = vmatpush1.bf16.msra.mxu0 0
      %314 = vmatprep.mubr.bf16.mxu0 0
      %315 = vmatmul.mubr.bf16.gmra.mrb[0].mxu0 %v226
      %v316 = vpop.f32.mrb[0].mxu0
      %v317 = vadd.f32 0.0, %v316
      %v318 = vpop.f32.mrb[0].mxu0
      %v319 = vpop.f32.mrb[0].mxu0
      %v320 = vadd.f32 0.0, %v319
      %v321 = vpop.f32.mrb[0].mxu0
      %322 = vmatprep.mubr.bf16.mxu0 0
      %323 = vmatmul.mubr.bf16.gmra.mrb[0].mxu0 %v227
      %v324 = vpop.f32.mrb[0].mxu0
      %v325 = vadd.f32 0.0, %v324
      %v326 = vpop.f32.mrb[0].mxu0
      %v327 = vpop.f32.mrb[0].mxu0
      %v328 = vadd.f32 0.0, %v327
      %v329 = vpop.f32.mrb[0].mxu0
      %330 = vmatprep.mubr.bf16.mxu0 0
      %331 = vmatmul.mubr.bf16.gmra.mrb[0].mxu0 %v228
      %v332 = vpop.f32.mrb[0].mxu0
      %v333 = vadd.f32 0.0, %v332
      %v334 = vpop.f32.mrb[0].mxu0
      %v335 = vpop.f32.mrb[0].mxu0
      %v336 = vadd.f32 0.0, %v335
      %v337 = vpop.f32.mrb[0].mxu0
      %338 = vmatprep.mubr.bf16.mxu0 0
      %339 = vmatmul.mubr.bf16.gmra.mrb[0].mxu0 %v229
      %v340 = vpop.f32.mrb[0].mxu0
      %v341 = vadd.f32 0.0, %v340
      %v342 = vpop.f32.mrb[0].mxu0
      %v343 = vpop.f32.mrb[0].mxu0
      %v344 = vadd.f32 0.0, %v343
      %v345 = vpop.f32.mrb[0].mxu0
      %346 = vdwg.mxu0
      %347 = vst [vmem:[%s179] sm:$0xff] %v317
      %348 = vst [vmem:[%s179 + $0x8] sm:$0xff] %v320
      %349 = vst [vmem:[%s179 + $0x10] sm:$0xff] %v325
      %350 = vst [vmem:[%s179 + $0x18] sm:$0xff] %v328
      %351 = vst [vmem:[%s179 + $0x20] sm:$0xff] %v333
      %352 = vst [vmem:[%s179 + $0x28] sm:$0xff] %v336
      %353 = vst [vmem:[%s179 + $0x30] sm:$0xff] %v341
      %354 = vst [vmem:[%s179 + $0x38] sm:$0xff] %v344
      %v355 = vadd.f32 %v317, %v320
      %v356 = vadd.f32 %v355, %v325
      %v357 = vadd.f32 %v356, %v328
      %v358 = vadd.f32 %v357, %v333
      %v359 = vadd.f32 %v358, %v336
      %v360 = vadd.f32 %v359, %v341
      %v361 = vadd.f32 %v360, %v344
      %v362 = vrot.slane %v361, 4
      %v363 = vadd.f32 %v361, %v362
      %v364 = vrot.slane %v363, 2
      %v365 = vadd.f32 %v363, %v364
      %v366 = vrot.slane %v365, 1
      %v367 = vadd.f32 %v365, %v366
      %v368 = vmul.f32 %v317, %v317
      %v369 = vmul.f32 %v320, %v320
      %v370 = vmul.f32 %v325, %v325
      %v371 = vmul.f32 %v328, %v328
      %v372 = vmul.f32 %v333, %v333
      %v373 = vmul.f32 %v336, %v336
      %v374 = vmul.f32 %v341, %v341
      %v375 = vmul.f32 %v344, %v344
      %v376 = vadd.f32 %v368, %v369
      %v377 = vadd.f32 %v376, %v370
      %v378 = vadd.f32 %v377, %v371
      %v379 = vadd.f32 %v378, %v372
      %v380 = vadd.f32 %v379, %v373
      %v381 = vadd.f32 %v380, %v374
      %v382 = vadd.f32 %v381, %v375
      %v383 = vrot.slane %v382, 4
      %v384 = vadd.f32 %v382, %v383
      %v385 = vrot.slane %v384, 2
      %v386 = vadd.f32 %v384, %v385
      %v387 = vrot.slane %v386, 1
      %v388 = vadd.f32 %v386, %v387
      %vm389 = vcmask 1040384
      %v390 = vsel %vm389, %v367, %v388
      %391 = vst [vmem:[%s184] sm:$0x3] %v390
      %s392 = smul.u32 8, %s15
      %p393 = scmp.lt.s32.totalorder %s392, 15
      %s394 = scalar_select %p393, %s392, 15
      %s395 = smul.addr %s394, 8
      %s396 = scalar_lea.vmem %s2, %s395
      %p397 = scmp.lt.s32.totalorder %s15, 1
      %s398 = scalar_select %p397, %s15, 1
      %s399 = smul.addr %s398, 2
      %s400 = scalar_lea.vmem %s3, %s399
      // Predicated region
      $region29: #{discriminator_forward.5} parent=27 // pred_check
        %p401 = pneg %p80
      $region30: #{discriminator_forward.5} parent=27 // pred_check_branch
        %403 = sbr.rel (%p401) target = $region32
      $region31: #{discriminator_forward.5} parent=27 // pred_region
        %s404 = smul.u32 8, %s15
      $region32: #{discriminator_forward.5} parent=27 // pred_fallthru
        _
      // Predicated region
      $region33: #{discriminator_forward.5} parent=27 // pred_check
        %p405 = pneg %p106
      $region34: #{discriminator_forward.5} parent=27 // pred_check_branch
        %407 = sbr.rel (%p405) target = $region36
      $region35: #{discriminator_forward.5} parent=27 // pred_region
        _
      $region36: #{discriminator_forward.5} parent=27 // pred_fallthru
        _
    $region28: #{discriminator_forward.5} parent=5 // pred_fallthru
      _
    %p408 = scmp.le.s32.totalorder 2, %s10
    // Predicated region
    $region37: #{discriminator_forward.5} parent=5 // pred_check
      %p409 = pneg %p408
    $region38: #{discriminator_forward.5} parent=5 // pred_check_branch
      %411 = sbr.rel (%p409) target = $region40
    $region39: #{discriminator_forward.5} parent=5 // pred_region
      %s412 = ssub.s32 %s10, 2
      // Predicated region
      $region41: #{discriminator_forward.5} parent=39 // pred_check
        %p413 = pneg %p86
      $region42: #{discriminator_forward.5} parent=39 // pred_check_branch
        %415 = sbr.rel (%p413) target = $region44
      $region43: #{discriminator_forward.5} parent=39 // pred_region
        %s416 = smul.u32 8, %s16
        %p417 = scmp.lt.s32.totalorder %s416, 15
        %s418 = scalar_select %p417, %s416, 15
        %s419 = smul.addr %s418, 8
        %s420 = scalar_lea.vmem %s2, %s419
      $region44: #{discriminator_forward.5} parent=39 // pred_fallthru
        _
      // Predicated region
      $region45: #{discriminator_forward.5} parent=39 // pred_check
        %p421 = pneg %p112
      $region46: #{discriminator_forward.5} parent=39 // pred_check_branch
        %423 = sbr.rel (%p421) target = $region48
      $region47: #{discriminator_forward.5} parent=39 // pred_region
        %p424 = scmp.lt.s32.totalorder %s16, 1
        %s425 = scalar_select %p424, %s16, 1
        %s426 = smul.addr %s425, 2
        %s427 = scalar_lea.vmem %s3, %s426
      $region48: #{discriminator_forward.5} parent=39 // pred_fallthru
        _
    $region40: #{discriminator_forward.5} parent=5 // pred_fallthru
      _
  $region6: #{discriminator_forward.5} parent=0 // loop_footer
    %s14 = sadd.s32 1, %s10
  $region7: #{discriminator_forward.5} parent=0 // loop_footer_branch
    %9 = sbr.rel target = $region3
  $region8: #{discriminator_forward.5} parent=0 // loop_exit
    _

// kernel: discriminator_forward.6
$region0: #{discriminator_forward.6}
  #allocation0 [shape = 'u32[]', space=smem, size = 0x4, offset = 0x4, fixed_abs, tag = 'smem constant byte address 0x4 - core index']
  #allocation1 [shape = 'u32[144,128]{1,0:T(1,128)}', space=vmem, size = 0x12000, scoped, tag = 'internal scratch']
  %s0 = inlined_call_operand.vmem [shape: bf16[32,256], index: 0, kind: input, shape index: {}]
  %s1 = inlined_call_operand.vmem [shape: bf16[256,128], index: 1, kind: input, shape index: {}]
  %s2 = inlined_call_operand.vmem [shape: f32[32,128], index: 2, kind: output, shape index: {0}]
  %s3 = inlined_call_operand.vmem [shape: f32[2,2,128], index: 3, kind: output, shape index: {1}]
  %4 = xla_tuple %s2, %s3
  %s5 = sld [smem:[#allocation0]]
  $region49: #{discriminator_forward.6} parent=0
    _
  %s7 = ssub.s32 1, %s5
  %s8 = scalar_select 0, %s7, %s5
  loop: start=0, step=1, limit=4
  $region2: #{discriminator_forward.6} parent=0 // loop_pre_header
    _
  $region3: #{discriminator_forward.6} parent=0 // loop_header
    %s10 = sphi 0, %s14
    %p11 = scmp.ge.s32.totalorder %s10, 4
    %s20 = sphi 0, %s22
    %s23 = sphi 0, %s20
    %s24 = sphi 0, %s23
    %s40 = sphi 0, %s24
    %s44 = sphi 0, %s44
    %s46 = sphi 0, %s44
    %s47 = sphi 0, %s46
    %s61 = sphi 0, %s47
    %s67 = sphi 0, %s69
    %s70 = sphi 0, %s67
    %s71 = sphi 0, %s70
    %s87 = sphi 0, %s71
    %s93 = sphi 0, %s95
    %s96 = sphi 0, %s93
    %s97 = sphi 0, %s96
    %s113 = sphi 0, %s97
  $region4: #{discriminator_forward.6} parent=0 // loop_header_branch
    %13 = sbr.rel (%p11) target = $region8
  $region5: #{discriminator_forward.6} parent=0 // loop_body
    %s15 = ssub.s32 %s10, 1
    %s16 = ssub.s32 %s10, 2
    %s17 = sadd.s32 %s10, 1
    %s18 = ssub.s32 %s10, %s17
    %p19 = scmp.eq.s32.totalorder %s18, 0
    %s21 = sadd.s32 %s20, 1
    %s22 = scalar_select %p19, %s20, %s21
    %p25 = pneg %p19
    %p26 = scmp.eq.s32.totalorder %s10, 1
    %p27 = por %p25, %p26
    %p28 = scmp.ne.s32.totalorder %s20, %s23
    %p29 = scmp.eq.s32.totalorder %s10, 0
    %p30 = por %p28, %p29
    %p31 = scmp.ne.s32.totalorder %s20, %s23
    %p32 = scmp.eq.s32.totalorder %s15, 1
    %p33 = por %p31, %p32
    %p34 = scmp.ne.s32.totalorder %s23, %s24
    %p35 = scmp.eq.s32.totalorder %s15, 0
    %p36 = por %p34, %p35
    %p37 = scmp.ne.s32.totalorder %s23, %s24
    %p38 = scmp.eq.s32.totalorder %s16, 1
    %p39 = por %p37, %p38
    %p41 = scmp.ne.s32.totalorder %s24, %s40
    %p42 = scmp.eq.s32.totalorder %s16, 0
    %p43 = por %p41, %p42
    %s45 = sadd.s32 %s44, 1
    %p48 = scmp.eq.s32.totalorder %s10, 1
    %p49 = scmp.ne.s32.totalorder %s44, %s46
    %p50 = scmp.eq.s32.totalorder %s10, 0
    %p51 = por %p49, %p50
    %p52 = scmp.ne.s32.totalorder %s44, %s46
    %p53 = scmp.eq.s32.totalorder %s15, 1
    %p54 = por %p52, %p53
    %p55 = scmp.ne.s32.totalorder %s46, %s47
    %p56 = scmp.eq.s32.totalorder %s15, 0
    %p57 = por %p55, %p56
    %p58 = scmp.ne.s32.totalorder %s46, %s47
    %p59 = scmp.eq.s32.totalorder %s16, 1
    %p60 = por %p58, %p59
    %p62 = scmp.ne.s32.totalorder %s47, %s61
    %p63 = scmp.eq.s32.totalorder %s16, 0
    %p64 = por %p62, %p63
    %s65 = ssub.s32 %s10, %s17
    %p66 = scmp.eq.s32.totalorder %s65, 0
    %s68 = sadd.s32 %s67, 1
    %s69 = scalar_select %p66, %s67, %s68
    %p72 = pneg %p66
    %p73 = scmp.eq.s32.totalorder %s10, 1
    %p74 = por %p72, %p73
    %p75 = scmp.ne.s32.totalorder %s67, %s70
    %p76 = scmp.eq.s32.totalorder %s10, 0
    %p77 = por %p75, %p76
    %p78 = scmp.ne.s32.totalorder %s67, %s70
    %p79 = scmp.eq.s32.totalorder %s15, 1
    %p80 = por %p78, %p79
    %p81 = scmp.ne.s32.totalorder %s70, %s71
    %p82 = scmp.eq.s32.totalorder %s15, 0
    %p83 = por %p81, %p82
    %p84 = scmp.ne.s32.totalorder %s70, %s71
    %p85 = scmp.eq.s32.totalorder %s16, 1
    %p86 = por %p84, %p85
    %p88 = scmp.ne.s32.totalorder %s71, %s87
    %p89 = scmp.eq.s32.totalorder %s16, 0
    %p90 = por %p88, %p89
    %s91 = ssub.s32 %s10, %s17
    %p92 = scmp.eq.s32.totalorder %s91, 0
    %s94 = sadd.s32 %s93, 1
    %s95 = scalar_select %p92, %s93, %s94
    %p98 = pneg %p92
    %p99 = scmp.eq.s32.totalorder %s10, 1
    %p100 = por %p98, %p99
    %p101 = scmp.ne.s32.totalorder %s93, %s96
    %p102 = scmp.eq.s32.totalorder %s10, 0
    %p103 = por %p101, %p102
    %p104 = scmp.ne.s32.totalorder %s93, %s96
    %p105 = scmp.eq.s32.totalorder %s15, 1
    %p106 = por %p104, %p105
    %p107 = scmp.ne.s32.totalorder %s96, %s97
    %p108 = scmp.eq.s32.totalorder %s15, 0
    %p109 = por %p107, %p108
    %p110 = scmp.ne.s32.totalorder %s96, %s97
    %p111 = scmp.eq.s32.totalorder %s16, 1
    %p112 = por %p110, %p111
    %p114 = scmp.ne.s32.totalorder %s97, %s113
    %p115 = scmp.eq.s32.totalorder %s16, 0
    %p116 = por %p114, %p115
    %p117 = scmp.le.s32.totalorder 1, %s10
    %p118 = scmp.lt.s32.totalorder %s10, 3
    %p119 = pnand %p117, %p118
    %p120 = pneg %p119
    // Predicated region
    $region9: #{discriminator_forward.6} parent=5 // pred_check
      _
    $region10: #{discriminator_forward.6} parent=5 // pred_check_branch
      %122 = sbr.rel (%p119) target = $region12
    $region11: #{discriminator_forward.6} parent=5 // pred_region
      %s123 = ssub.s32 %s10, 1
      // Predicated region
      $region13: #{discriminator_forward.6} parent=11 // pred_check
        %p124 = pneg %p57
      $region14: #{discriminator_forward.6} parent=11 // pred_check_branch
        %126 = sbr.rel (%p124) target = $region16
      $region15: #{discriminator_forward.6} parent=11 // pred_region
        _
      $region16: #{discriminator_forward.6} parent=11 // pred_fallthru
        _
    $region12: #{discriminator_forward.6} parent=5 // pred_fallthru
      _
    %p127 = scmp.lt.s32.totalorder %s10, 2
    // Predicated region
    $region17: #{discriminator_forward.6} parent=5 // pred_check
      %p128 = pneg %p127
    $region18: #{discriminator_forward.6} parent=5 // pred_check_branch
      %130 = sbr.rel (%p128) target = $region20
    $region19: #{discriminator_forward.6} parent=5 // pred_region
      // Predicated region
      $region21: #{discriminator_forward.6} parent=19 // pred_check
        %p131 = pneg %p30
      $region22: #{discriminator_forward.6} parent=19 // pred_check_branch
        %133 = sbr.rel (%p131) target = $region24
      $region23: #{discriminator_forward.6} parent=19 // pred_region
        %s134 = smul.u32 2, %s10
        %p135 = scmp.lt.s32.totalorder %s134, 3
        %s136 = scalar_select %p135, %s134, 3
        %s137 = smul.addr %s136, 2
        %s138 = smul.addr %s137, 4
        %s139 = scalar_lea.vmem %s0, %s138
        %s140 = smul.u32 2, %s10
      $region24: #{discriminator_forward.6} parent=19 // pred_fallthru
        _
    $region20: #{discriminator_forward.6} parent=5 // pred_fallthru
      _
    %p141 = scmp.le.s32.totalorder 1, %s10
    %p142 = scmp.lt.s32.totalorder %s10, 3
    %p143 = pnand %p141, %p142
    %p144 = pneg %p143
    // Predicated region
    $region25: #{discriminator_forward.6} parent=5 // pred_check
      _
    $region26: #{discriminator_forward.6} parent=5 // pred_check_branch
      %146 = sbr.rel (%p143) target = $region28
    $region27: #{discriminator_forward.6} parent=5 // pred_region
      %s147 = ssub.s32 %s10, 1
      %s148 = smul.u32 2, %s15
      %p149 = scmp.lt.s32.totalorder %s148, 3
      %s150 = scalar_select %p149, %s148, 3
      %s151 = smul.addr %s150, 2
      %s152 = smul.addr %s151, 4
      %s153 = scalar_lea.vmem %s0, %s152
      %p154 = pneg %p36
      %p155 = pneg %p33
      %p156 = pneg %p57
      %p157 = pneg %p54
      %p158 = pneg %p83
      %p159 = pneg %p80
      %s160 = smul.u32 2, %s15
      %p161 = scmp.lt.s32.totalorder %s160, 3
      %s162 = scalar_select %p161, %s160, 3
      %s163 = smul.addr %s162, 8
      %s164 = scalar_lea.vmem %s2, %s163
      %p165 = pneg %p109
      %p166 = pneg %p106
      %p167 = scmp.lt.s32.totalorder %s15, 1
      %s168 = scalar_select %p167, %s15, 1
      %s169 = smul.addr %s168, 2
      %s170 = scalar_lea.vmem %s3, %s169
      %s171 = smul.u32 2, %s15
      %p172 = scmp.lt.s32.totalorder %s171, 3
      %s173 = scalar_select %p172, %s171, 3
      %s174 = smul.addr %s173, 2
      %s175 = smul.addr %s174, 4
      %s176 = scalar_lea.vmem %s0, %s175
      %s177 = smul.u32 2, %s15
      %s178 = smul.u32 2, %s15
      %p179 = scmp.lt.s32.totalorder %s178, 3
      %s180 = scalar_select %p179, %s178, 3
      %s181 = smul.addr %s180, 8
      %s182 = scalar_lea.vmem %s2, %s181
      %s183 = smul.u32 2, %s15
      %p184 = scmp.lt.s32.totalorder %s15, 1
      %s185 = scalar_select %p184, %s15, 1
      %s186 = smul.addr %s185, 2
      %s187 = scalar_lea.vmem %s3, %s186
      %v189 = vld [vmem:[%s176] sm:$0xff]
      %v190 = vld [vmem:[%s176 + $0x8] sm:$0xff]
      %v191 = vld [vmem:[%s1] sm:$0xf]
      %v192 = vld [vmem:[%s1 + $0x4] sm:$0xf]
      %v193 = vld [vmem:[%s1 + $0x8] sm:$0xf]
      %v194 = vld [vmem:[%s1 + $0xc] sm:$0xf]
      %v195 = vld [vmem:[%s1 + $0x10] sm:$0xf]
      %v196 = vld [vmem:[%s1 + $0x14] sm:$0xf]
      %v197 = vld [vmem:[%s1 + $0x18] sm:$0xf]
      %v198 = vld [vmem:[%s1 + $0x1c] sm:$0xf]
      %v199 = vld [vmem:[%s1 + $0x20] sm:$0xf]
      %v200 = vld [vmem:[%s1 + $0x24] sm:$0xf]
      %v201 = vld [vmem:[%s1 + $0x28] sm:$0xf]
      %v202 = vld [vmem:[%s1 + $0x2c] sm:$0xf]
      %v203 = vld [vmem:[%s1 + $0x30] sm:$0xf]
      %v204 = vld [vmem:[%s1 + $0x34] sm:$0xf]
      %v205 = vld [vmem:[%s1 + $0x38] sm:$0xf]
      %v206 = vld [vmem:[%s1 + $0x3c] sm:$0xf]
      %v207 = vld [vmem:[%s1 + $0x40] sm:$0xf]
      %v208 = vld [vmem:[%s1 + $0x44] sm:$0xf]
      %v209 = vld [vmem:[%s1 + $0x48] sm:$0xf]
      %v210 = vld [vmem:[%s1 + $0x4c] sm:$0xf]
      %v211 = vld [vmem:[%s1 + $0x50] sm:$0xf]
      %v212 = vld [vmem:[%s1 + $0x54] sm:$0xf]
      %v213 = vld [vmem:[%s1 + $0x58] sm:$0xf]
      %v214 = vld [vmem:[%s1 + $0x5c] sm:$0xf]
      %v215 = vld [vmem:[%s1 + $0x60] sm:$0xf]
      %v216 = vld [vmem:[%s1 + $0x64] sm:$0xf]
      %v217 = vld [vmem:[%s1 + $0x68] sm:$0xf]
      %v218 = vld [vmem:[%s1 + $0x6c] sm:$0xf]
      %v219 = vld [vmem:[%s1 + $0x70] sm:$0xf]
      %v220 = vld [vmem:[%s1 + $0x74] sm:$0xf]
      %v221 = vld [vmem:[%s1 + $0x78] sm:$0xf]
      %v222 = vld [vmem:[%s1 + $0x7c] sm:$0xf]
      %v225 = vunpack.c.l.b16 %v189
      %v226 = vunpack.c.h.b16 %v189
      %v227 = vunpack.c.l.b16 %v190
      %v228 = vunpack.c.h.b16 %v190
      %v229 = vpack.c.b16 %v227, %v225
      %v230 = vpack.c.b16 %v228, %v226
      %v265 = vunpack.c.l.b16 %v191
      %v266 = vunpack.c.l.b16 %v192
      %v267 = vunpack.c.l.b16 %v193
      %v268 = vunpack.c.l.b16 %v194
      %v269 = vunpack.c.l.b16 %v195
      %v270 = vunpack.c.l.b16 %v196
      %v271 = vunpack.c.l.b16 %v197
      %v272 = vunpack.c.l.b16 %v198
      %v273 = vunpack.c.l.b16 %v199
      %v274 = vunpack.c.l.b16 %v200
      %v275 = vunpack.c.l.b16 %v201
      %v276 = vunpack.c.l.b16 %v202
      %v277 = vunpack.c.l.b16 %v203
      %v278 = vunpack.c.l.b16 %v204
      %v279 = vunpack.c.l.b16 %v205
      %v280 = vunpack.c.l.b16 %v206
      %v281 = vunpack.c.l.b16 %v207
      %v282 = vunpack.c.l.b16 %v208
      %v283 = vunpack.c.l.b16 %v209
      %v284 = vunpack.c.l.b16 %v210
      %v285 = vunpack.c.l.b16 %v211
      %v286 = vunpack.c.l.b16 %v212
      %v287 = vunpack.c.l.b16 %v213
      %v288 = vunpack.c.l.b16 %v214
      %v289 = vunpack.c.l.b16 %v215
      %v290 = vunpack.c.l.b16 %v216
      %v291 = vunpack.c.l.b16 %v217
      %v292 = vunpack.c.l.b16 %v218
      %v293 = vunpack.c.l.b16 %v219
      %v294 = vunpack.c.l.b16 %v220
      %v295 = vunpack.c.l.b16 %v221
      %v296 = vunpack.c.l.b16 %v222
      %v297 = vpack.c.b16 %v266, %v265
      %v298 = vpack.c.b16 %v268, %v267
      %v299 = vpack.c.b16 %v270, %v269
      %v300 = vpack.c.b16 %v272, %v271
      %v301 = vpack.c.b16 %v274, %v273
      %v302 = vpack.c.b16 %v276, %v275
      %v303 = vpack.c.b16 %v278, %v277
      %v304 = vpack.c.b16 %v280, %v279
      %v305 = vpack.c.b16 %v282, %v281
      %v306 = vpack.c.b16 %v284, %v283
      %v307 = vpack.c.b16 %v286, %v285
      %v308 = vpack.c.b16 %v288, %v287
      %v309 = vpack.c.b16 %v290, %v289
      %v310 = vpack.c.b16 %v292, %v291
      %v311 = vpack.c.b16 %v294, %v293
      %v312 = vpack.c.b16 %v296, %v295
      %329 = vmatprep.subr.bf16.mxu0 0
      %330 = vmatpush1.bf16.msra.mxu0 %v297
      %331 = vmatprep.subr.bf16.mxu0 0
      %332 = vmatpush1.bf16.msra.mxu0 %v298
      %333 = vmatprep.subr.bf16.mxu0 0
      %334 = vmatpush1.bf16.msra.mxu0 %v299
      %335 = vmatprep.subr.bf16.mxu0 0
      %336 = vmatpush1.bf16.msra.mxu0 %v300
      %337 = vmatprep.subr.bf16.mxu0 0
      %338 = vmatpush1.bf16.msra.mxu0 %v301
      %339 = vmatprep.subr.bf16.mxu0 0
      %340 = vmatpush1.bf16.msra.mxu0 %v302
      %341 = vmatprep.subr.bf16.mxu0 0
      %342 = vmatpush1.bf16.msra.mxu0 %v303
      %343 = vmatprep.subr.bf16.mxu0 0
      %344 = vmatpush1.bf16.msra.mxu0 %v304
      %345 = vmatprep.subr.bf16.mxu0 0
      %346 = vmatpush1.bf16.msra.mxu0 %v305
      %347 = vmatprep.subr.bf16.mxu0 0
      %348 = vmatpush1.bf16.msra.mxu0 %v306
      %349 = vmatprep.subr.bf16.mxu0 0
      %350 = vmatpush1.bf16.msra.mxu0 %v307
      %351 = vmatprep.subr.bf16.mxu0 0
      %352 = vmatpush1.bf16.msra.mxu0 %v308
      %353 = vmatprep.subr.bf16.mxu0 0
      %354 = vmatpush1.bf16.msra.mxu0 %v309
      %355 = vmatprep.subr.bf16.mxu0 0
      %356 = vmatpush1.bf16.msra.mxu0 %v310
      %357 = vmatprep.subr.bf16.mxu0 0
      %358 = vmatpush1.bf16.msra.mxu0 %v311
      %359 = vmatprep.subr.bf16.mxu0 0
      %360 = vmatpush1.bf16.msra.mxu0 %v312
      %361 = vmatprep.mubr.bf16.mxu0 %v230
      %362 = vmatmul.mubr.bf16.gmra.mrb[0].mxu0 %v229
      %v363 = vpop.f32.mrb[0].mxu0
      %v364 = vadd.f32 0.0, %v363
      %v365 = vpop.f32.mrb[0].mxu0
      %v366 = vpop.f32.mrb[0].mxu0
      %v367 = vadd.f32 0.0, %v366
      %v368 = vpop.f32.mrb[0].mxu0
      %369 = vdwg.mxu0
      %370 = vst [vmem:[%s182] sm:$0xff] %v364
      %371 = vst [vmem:[%s182 + $0x8] sm:$0xff] %v367
      %v372 = vadd.f32 %v364, %v367
      %v373 = vrot.slane %v372, 4
      %v374 = vadd.f32 %v372, %v373
      %v375 = vrot.slane %v374, 2
      %v376 = vadd.f32 %v374, %v375
      %v377 = vrot.slane %v376, 1
      %v378 = vadd.f32 %v376, %v377
      %v379 = vmul.f32 %v364, %v364
      %v380 = vmul.f32 %v367, %v367
      %v381 = vadd.f32 %v379, %v380
      %v382 = vrot.slane %v381, 4
      %v383 = vadd.f32 %v381, %v382
      %v384 = vrot.slane %v383, 2
      %v385 = vadd.f32 %v383, %v384
      %v386 = vrot.slane %v385, 1
      %v387 = vadd.f32 %v385, %v386
      %vm388 = vcmask 1040384
      %v389 = vsel %vm388, %v378, %v387
      %390 = vst [vmem:[%s187] sm:$0x3] %v389
      %s391 = smul.u32 2, %s15
      %p392 = scmp.lt.s32.totalorder %s391, 3
      %s393 = scalar_select %p392, %s391, 3
      %s394 = smul.addr %s393, 8
      %s395 = scalar_lea.vmem %s2, %s394
      %p396 = scmp.lt.s32.totalorder %s15, 1
      %s397 = scalar_select %p396, %s15, 1
      %s398 = smul.addr %s397, 2
      %s399 = scalar_lea.vmem %s3, %s398
      // Predicated region
      $region29: #{discriminator_forward.6} parent=27 // pred_check
        %p400 = pneg %p80
      $region30: #{discriminator_forward.6} parent=27 // pred_check_branch
        %402 = sbr.rel (%p400) target = $region32
      $region31: #{discriminator_forward.6} parent=27 // pred_region
        %s403 = smul.u32 2, %s15
      $region32: #{discriminator_forward.6} parent=27 // pred_fallthru
        _
      // Predicated region
      $region33: #{discriminator_forward.6} parent=27 // pred_check
        %p404 = pneg %p106
      $region34: #{discriminator_forward.6} parent=27 // pred_check_branch
        %406 = sbr.rel (%p404) target = $region36
      $region35: #{discriminator_forward.6} parent=27 // pred_region
        _
      $region36: #{discriminator_forward.6} parent=27 // pred_fallthru
        _
    $region28: #{discriminator_forward.6} parent=5 // pred_fallthru
      _
    %p407 = scmp.le.s32.totalorder 2, %s10
    // Predicated region
    $region37: #{discriminator_forward.6} parent=5 // pred_check
      %p408 = pneg %p407
    $region38: #{discriminator_forward.6} parent=5 // pred_check_branch
      %410 = sbr.rel (%p408) target = $region40
    $region39: #{discriminator_forward.6} parent=5 // pred_region
      %s411 = ssub.s32 %s10, 2
      // Predicated region
      $region41: #{discriminator_forward.6} parent=39 // pred_check
        %p412 = pneg %p86
      $region42: #{discriminator_forward.6} parent=39 // pred_check_branch
        %414 = sbr.rel (%p412) target = $region44
      $region43: #{discriminator_forward.6} parent=39 // pred_region
        %s415 = smul.u32 2, %s16
        %p416 = scmp.lt.s32.totalorder %s415, 3
        %s417 = scalar_select %p416, %s415, 3
        %s418 = smul.addr %s417, 8
        %s419 = scalar_lea.vmem %s2, %s418
      $region44: #{discriminator_forward.6} parent=39 // pred_fallthru
        _
      // Predicated region
      $region45: #{discriminator_forward.6} parent=39 // pred_check
        %p420 = pneg %p112
      $region46: #{discriminator_forward.6} parent=39 // pred_check_branch
        %422 = sbr.rel (%p420) target = $region48
      $region47: #{discriminator_forward.6} parent=39 // pred_region
        %p423 = scmp.lt.s32.totalorder %s16, 1
        %s424 = scalar_select %p423, %s16, 1
        %s425 = smul.addr %s424, 2
        %s426 = scalar_lea.vmem %s3, %s425
      $region48: #{discriminator_forward.6} parent=39 // pred_fallthru
        _
    $region40: #{discriminator_forward.6} parent=5 // pred_fallthru
      _
  $region6: #{discriminator_forward.6} parent=0 // loop_footer
    %s14 = sadd.s32 1, %s10
  $region7: #{discriminator_forward.6} parent=0 // loop_footer_branch
    %9 = sbr.rel target = $region3
  $region8: #{discriminator_forward.6} parent=0 // loop_exit
    _

// kernel: discriminator_forward.7
$region0: #{discriminator_forward.7}
  #allocation0 [shape = 'u32[]', space=smem, size = 0x4, offset = 0x4, fixed_abs, tag = 'smem constant byte address 0x4 - core index']
  #allocation1 [shape = 'u32[144,128]{1,0:T(1,128)}', space=vmem, size = 0x12000, scoped, tag = 'internal scratch']
  %s0 = inlined_call_operand.vmem [shape: bf16[32,512], index: 0, kind: input, shape index: {}]
  %s1 = inlined_call_operand.vmem [shape: bf16[512,128], index: 1, kind: input, shape index: {}]
  %s2 = inlined_call_operand.vmem [shape: f32[32,128], index: 2, kind: output, shape index: {0}]
  %s3 = inlined_call_operand.vmem [shape: f32[2,2,128], index: 3, kind: output, shape index: {1}]
  %4 = xla_tuple %s2, %s3
  %s5 = sld [smem:[#allocation0]]
  $region49: #{discriminator_forward.7} parent=0
    _
  %s7 = ssub.s32 1, %s5
  %s8 = scalar_select 0, %s7, %s5
  loop: start=0, step=1, limit=4
  $region2: #{discriminator_forward.7} parent=0 // loop_pre_header
    _
  $region3: #{discriminator_forward.7} parent=0 // loop_header
    %s10 = sphi 0, %s14
    %p11 = scmp.ge.s32.totalorder %s10, 4
    %s20 = sphi 0, %s22
    %s23 = sphi 0, %s20
    %s24 = sphi 0, %s23
    %s40 = sphi 0, %s24
    %s44 = sphi 0, %s44
    %s46 = sphi 0, %s44
    %s47 = sphi 0, %s46
    %s61 = sphi 0, %s47
    %s67 = sphi 0, %s69
    %s70 = sphi 0, %s67
    %s71 = sphi 0, %s70
    %s87 = sphi 0, %s71
    %s93 = sphi 0, %s95
    %s96 = sphi 0, %s93
    %s97 = sphi 0, %s96
    %s113 = sphi 0, %s97
  $region4: #{discriminator_forward.7} parent=0 // loop_header_branch
    %13 = sbr.rel (%p11) target = $region8
  $region5: #{discriminator_forward.7} parent=0 // loop_body
    %s15 = ssub.s32 %s10, 1
    %s16 = ssub.s32 %s10, 2
    %s17 = sadd.s32 %s10, 1
    %s18 = ssub.s32 %s10, %s17
    %p19 = scmp.eq.s32.totalorder %s18, 0
    %s21 = sadd.s32 %s20, 1
    %s22 = scalar_select %p19, %s20, %s21
    %p25 = pneg %p19
    %p26 = scmp.eq.s32.totalorder %s10, 1
    %p27 = por %p25, %p26
    %p28 = scmp.ne.s32.totalorder %s20, %s23
    %p29 = scmp.eq.s32.totalorder %s10, 0
    %p30 = por %p28, %p29
    %p31 = scmp.ne.s32.totalorder %s20, %s23
    %p32 = scmp.eq.s32.totalorder %s15, 1
    %p33 = por %p31, %p32
    %p34 = scmp.ne.s32.totalorder %s23, %s24
    %p35 = scmp.eq.s32.totalorder %s15, 0
    %p36 = por %p34, %p35
    %p37 = scmp.ne.s32.totalorder %s23, %s24
    %p38 = scmp.eq.s32.totalorder %s16, 1
    %p39 = por %p37, %p38
    %p41 = scmp.ne.s32.totalorder %s24, %s40
    %p42 = scmp.eq.s32.totalorder %s16, 0
    %p43 = por %p41, %p42
    %s45 = sadd.s32 %s44, 1
    %p48 = scmp.eq.s32.totalorder %s10, 1
    %p49 = scmp.ne.s32.totalorder %s44, %s46
    %p50 = scmp.eq.s32.totalorder %s10, 0
    %p51 = por %p49, %p50
    %p52 = scmp.ne.s32.totalorder %s44, %s46
    %p53 = scmp.eq.s32.totalorder %s15, 1
    %p54 = por %p52, %p53
    %p55 = scmp.ne.s32.totalorder %s46, %s47
    %p56 = scmp.eq.s32.totalorder %s15, 0
    %p57 = por %p55, %p56
    %p58 = scmp.ne.s32.totalorder %s46, %s47
    %p59 = scmp.eq.s32.totalorder %s16, 1
    %p60 = por %p58, %p59
    %p62 = scmp.ne.s32.totalorder %s47, %s61
    %p63 = scmp.eq.s32.totalorder %s16, 0
    %p64 = por %p62, %p63
    %s65 = ssub.s32 %s10, %s17
    %p66 = scmp.eq.s32.totalorder %s65, 0
    %s68 = sadd.s32 %s67, 1
    %s69 = scalar_select %p66, %s67, %s68
    %p72 = pneg %p66
    %p73 = scmp.eq.s32.totalorder %s10, 1
    %p74 = por %p72, %p73
    %p75 = scmp.ne.s32.totalorder %s67, %s70
    %p76 = scmp.eq.s32.totalorder %s10, 0
    %p77 = por %p75, %p76
    %p78 = scmp.ne.s32.totalorder %s67, %s70
    %p79 = scmp.eq.s32.totalorder %s15, 1
    %p80 = por %p78, %p79
    %p81 = scmp.ne.s32.totalorder %s70, %s71
    %p82 = scmp.eq.s32.totalorder %s15, 0
    %p83 = por %p81, %p82
    %p84 = scmp.ne.s32.totalorder %s70, %s71
    %p85 = scmp.eq.s32.totalorder %s16, 1
    %p86 = por %p84, %p85
    %p88 = scmp.ne.s32.totalorder %s71, %s87
    %p89 = scmp.eq.s32.totalorder %s16, 0
    %p90 = por %p88, %p89
    %s91 = ssub.s32 %s10, %s17
    %p92 = scmp.eq.s32.totalorder %s91, 0
    %s94 = sadd.s32 %s93, 1
    %s95 = scalar_select %p92, %s93, %s94
    %p98 = pneg %p92
    %p99 = scmp.eq.s32.totalorder %s10, 1
    %p100 = por %p98, %p99
    %p101 = scmp.ne.s32.totalorder %s93, %s96
    %p102 = scmp.eq.s32.totalorder %s10, 0
    %p103 = por %p101, %p102
    %p104 = scmp.ne.s32.totalorder %s93, %s96
    %p105 = scmp.eq.s32.totalorder %s15, 1
    %p106 = por %p104, %p105
    %p107 = scmp.ne.s32.totalorder %s96, %s97
    %p108 = scmp.eq.s32.totalorder %s15, 0
    %p109 = por %p107, %p108
    %p110 = scmp.ne.s32.totalorder %s96, %s97
    %p111 = scmp.eq.s32.totalorder %s16, 1
    %p112 = por %p110, %p111
    %p114 = scmp.ne.s32.totalorder %s97, %s113
    %p115 = scmp.eq.s32.totalorder %s16, 0
    %p116 = por %p114, %p115
    %p117 = scmp.le.s32.totalorder 1, %s10
    %p118 = scmp.lt.s32.totalorder %s10, 3
    %p119 = pnand %p117, %p118
    %p120 = pneg %p119
    // Predicated region
    $region9: #{discriminator_forward.7} parent=5 // pred_check
      _
    $region10: #{discriminator_forward.7} parent=5 // pred_check_branch
      %122 = sbr.rel (%p119) target = $region12
    $region11: #{discriminator_forward.7} parent=5 // pred_region
      %s123 = ssub.s32 %s10, 1
      // Predicated region
      $region13: #{discriminator_forward.7} parent=11 // pred_check
        %p124 = pneg %p57
      $region14: #{discriminator_forward.7} parent=11 // pred_check_branch
        %126 = sbr.rel (%p124) target = $region16
      $region15: #{discriminator_forward.7} parent=11 // pred_region
        _
      $region16: #{discriminator_forward.7} parent=11 // pred_fallthru
        _
    $region12: #{discriminator_forward.7} parent=5 // pred_fallthru
      _
    %p127 = scmp.lt.s32.totalorder %s10, 2
    // Predicated region
    $region17: #{discriminator_forward.7} parent=5 // pred_check
      %p128 = pneg %p127
    $region18: #{discriminator_forward.7} parent=5 // pred_check_branch
      %130 = sbr.rel (%p128) target = $region20
    $region19: #{discriminator_forward.7} parent=5 // pred_region
      // Predicated region
      $region21: #{discriminator_forward.7} parent=19 // pred_check
        %p131 = pneg %p30
      $region22: #{discriminator_forward.7} parent=19 // pred_check_branch
        %133 = sbr.rel (%p131) target = $region24
      $region23: #{discriminator_forward.7} parent=19 // pred_region
        %s134 = smul.u32 2, %s10
        %p135 = scmp.lt.s32.totalorder %s134, 3
        %s136 = scalar_select %p135, %s134, 3
        %s137 = smul.addr %s136, 4
        %s138 = smul.addr %s137, 4
        %s139 = scalar_lea.vmem %s0, %s138
        %s140 = smul.u32 2, %s10
      $region24: #{discriminator_forward.7} parent=19 // pred_fallthru
        _
    $region20: #{discriminator_forward.7} parent=5 // pred_fallthru
      _
    %p141 = scmp.le.s32.totalorder 1, %s10
    %p142 = scmp.lt.s32.totalorder %s10, 3
    %p143 = pnand %p141, %p142
    %p144 = pneg %p143
    // Predicated region
    $region25: #{discriminator_forward.7} parent=5 // pred_check
      _
    $region26: #{discriminator_forward.7} parent=5 // pred_check_branch
      %146 = sbr.rel (%p143) target = $region28
    $region27: #{discriminator_forward.7} parent=5 // pred_region
      %s147 = ssub.s32 %s10, 1
      %s148 = smul.u32 2, %s15
      %p149 = scmp.lt.s32.totalorder %s148, 3
      %s150 = scalar_select %p149, %s148, 3
      %s151 = smul.addr %s150, 4
      %s152 = smul.addr %s151, 4
      %s153 = scalar_lea.vmem %s0, %s152
      %p154 = pneg %p36
      %p155 = pneg %p33
      %p156 = pneg %p57
      %p157 = pneg %p54
      %p158 = pneg %p83
      %p159 = pneg %p80
      %s160 = smul.u32 2, %s15
      %p161 = scmp.lt.s32.totalorder %s160, 3
      %s162 = scalar_select %p161, %s160, 3
      %s163 = smul.addr %s162, 8
      %s164 = scalar_lea.vmem %s2, %s163
      %p165 = pneg %p109
      %p166 = pneg %p106
      %p167 = scmp.lt.s32.totalorder %s15, 1
      %s168 = scalar_select %p167, %s15, 1
      %s169 = smul.addr %s168, 2
      %s170 = scalar_lea.vmem %s3, %s169
      %s171 = smul.u32 2, %s15
      %p172 = scmp.lt.s32.totalorder %s171, 3
      %s173 = scalar_select %p172, %s171, 3
      %s174 = smul.addr %s173, 4
      %s175 = smul.addr %s174, 4
      %s176 = scalar_lea.vmem %s0, %s175
      %s177 = smul.u32 2, %s15
      %s178 = smul.u32 2, %s15
      %p179 = scmp.lt.s32.totalorder %s178, 3
      %s180 = scalar_select %p179, %s178, 3
      %s181 = smul.addr %s180, 8
      %s182 = scalar_lea.vmem %s2, %s181
      %s183 = smul.u32 2, %s15
      %p184 = scmp.lt.s32.totalorder %s15, 1
      %s185 = scalar_select %p184, %s15, 1
      %s186 = smul.addr %s185, 2
      %s187 = scalar_lea.vmem %s3, %s186
      %v189 = vld [vmem:[%s176] sm:$0xff]
      %v190 = vld [vmem:[%s176 + $0x8] sm:$0xff]
      %v191 = vld [vmem:[%s176 + $0x10] sm:$0xff]
      %v192 = vld [vmem:[%s176 + $0x18] sm:$0xff]
      %v193 = vld [vmem:[%s1] sm:$0xf]
      %v194 = vld [vmem:[%s1 + $0x4] sm:$0xf]
      %v195 = vld [vmem:[%s1 + $0x8] sm:$0xf]
      %v196 = vld [vmem:[%s1 + $0xc] sm:$0xf]
      %v197 = vld [vmem:[%s1 + $0x10] sm:$0xf]
      %v198 = vld [vmem:[%s1 + $0x14] sm:$0xf]
      %v199 = vld [vmem:[%s1 + $0x18] sm:$0xf]
      %v200 = vld [vmem:[%s1 + $0x1c] sm:$0xf]
      %v201 = vld [vmem:[%s1 + $0x20] sm:$0xf]
      %v202 = vld [vmem:[%s1 + $0x24] sm:$0xf]
      %v203 = vld [vmem:[%s1 + $0x28] sm:$0xf]
      %v204 = vld [vmem:[%s1 + $0x2c] sm:$0xf]
      %v205 = vld [vmem:[%s1 + $0x30] sm:$0xf]
      %v206 = vld [vmem:[%s1 + $0x34] sm:$0xf]
      %v207 = vld [vmem:[%s1 + $0x38] sm:$0xf]
      %v208 = vld [vmem:[%s1 + $0x3c] sm:$0xf]
      %v209 = vld [vmem:[%s1 + $0x40] sm:$0xf]
      %v210 = vld [vmem:[%s1 + $0x44] sm:$0xf]
      %v211 = vld [vmem:[%s1 + $0x48] sm:$0xf]
      %v212 = vld [vmem:[%s1 + $0x4c] sm:$0xf]
      %v213 = vld [vmem:[%s1 + $0x50] sm:$0xf]
      %v214 = vld [vmem:[%s1 + $0x54] sm:$0xf]
      %v215 = vld [vmem:[%s1 + $0x58] sm:$0xf]
      %v216 = vld [vmem:[%s1 + $0x5c] sm:$0xf]
      %v217 = vld [vmem:[%s1 + $0x60] sm:$0xf]
      %v218 = vld [vmem:[%s1 + $0x64] sm:$0xf]
      %v219 = vld [vmem:[%s1 + $0x68] sm:$0xf]
      %v220 = vld [vmem:[%s1 + $0x6c] sm:$0xf]
      %v221 = vld [vmem:[%s1 + $0x70] sm:$0xf]
      %v222 = vld [vmem:[%s1 + $0x74] sm:$0xf]
      %v223 = vld [vmem:[%s1 + $0x78] sm:$0xf]
      %v224 = vld [vmem:[%s1 + $0x7c] sm:$0xf]
      %v225 = vld [vmem:[%s1 + $0x80] sm:$0xf]
      %v226 = vld [vmem:[%s1 + $0x84] sm:$0xf]
      %v227 = vld [vmem:[%s1 + $0x88] sm:$0xf]
      %v228 = vld [vmem:[%s1 + $0x8c] sm:$0xf]
      %v229 = vld [vmem:[%s1 + $0x90] sm:$0xf]
      %v230 = vld [vmem:[%s1 + $0x94] sm:$0xf]
      %v231 = vld [vmem:[%s1 + $0x98] sm:$0xf]
      %v232 = vld [vmem:[%s1 + $0x9c] sm:$0xf]
      %v233 = vld [vmem:[%s1 + $0xa0] sm:$0xf]
      %v234 = vld [vmem:[%s1 + $0xa4] sm:$0xf]
      %v235 = vld [vmem:[%s1 + $0xa8] sm:$0xf]
      %v236 = vld [vmem:[%s1 + $0xac] sm:$0xf]
      %v237 = vld [vmem:[%s1 + $0xb0] sm:$0xf]
      %v238 = vld [vmem:[%s1 + $0xb4] sm:$0xf]
      %v239 = vld [vmem:[%s1 + $0xb8] sm:$0xf]
      %v240 = vld [vmem:[%s1 + $0xbc] sm:$0xf]
      %v241 = vld [vmem:[%s1 + $0xc0] sm:$0xf]
      %v242 = vld [vmem:[%s1 + $0xc4] sm:$0xf]
      %v243 = vld [vmem:[%s1 + $0xc8] sm:$0xf]
      %v244 = vld [vmem:[%s1 + $0xcc] sm:$0xf]
      %v245 = vld [vmem:[%s1 + $0xd0] sm:$0xf]
      %v246 = vld [vmem:[%s1 + $0xd4] sm:$0xf]
      %v247 = vld [vmem:[%s1 + $0xd8] sm:$0xf]
      %v248 = vld [vmem:[%s1 + $0xdc] sm:$0xf]
      %v249 = vld [vmem:[%s1 + $0xe0] sm:$0xf]
      %v250 = vld [vmem:[%s1 + $0xe4] sm:$0xf]
      %v251 = vld [vmem:[%s1 + $0xe8] sm:$0xf]
      %v252 = vld [vmem:[%s1 + $0xec] sm:$0xf]
      %v253 = vld [vmem:[%s1 + $0xf0] sm:$0xf]
      %v254 = vld [vmem:[%s1 + $0xf4] sm:$0xf]
      %v255 = vld [vmem:[%s1 + $0xf8] sm:$0xf]
      %v256 = vld [vmem:[%s1 + $0xfc] sm:$0xf]
      %v261 = vunpack.c.l.b16 %v189
      %v262 = vunpack.c.h.b16 %v189
      %v263 = vunpack.c.l.b16 %v190
      %v264 = vunpack.c.h.b16 %v190
      %v265 = vunpack.c.l.b16 %v191
      %v266 = vunpack.c.h.b16 %v191
      %v267 = vunpack.c.l.b16 %v192
      %v268 = vunpack.c.h.b16 %v192
      %v269 = vpack.c.b16 %v265, %v261
      %v270 = vpack.c.b16 %v266, %v262
      %v271 = vpack.c.b16 %v267, %v263
      %v272 = vpack.c.b16 %v268, %v264
      %v341 = vunpack.c.l.b16 %v193
      %v342 = vunpack.c.l.b16 %v194
      %v343 = vunpack.c.l.b16 %v195
      %v344 = vunpack.c.l.b16 %v196
      %v345 = vunpack.c.l.b16 %v197
      %v346 = vunpack.c.l.b16 %v198
      %v347 = vunpack.c.l.b16 %v199
      %v348 = vunpack.c.l.b16 %v200
      %v349 = vunpack.c.l.b16 %v201
      %v350 = vunpack.c.l.b16 %v202
      %v351 = vunpack.c.l.b16 %v203
      %v352 = vunpack.c.l.b16 %v204
      %v353 = vunpack.c.l.b16 %v205
      %v354 = vunpack.c.l.b16 %v206
      %v355 = vunpack.c.l.b16 %v207
      %v356 = vunpack.c.l.b16 %v208
      %v357 = vunpack.c.l.b16 %v209
      %v358 = vunpack.c.l.b16 %v210
      %v359 = vunpack.c.l.b16 %v211
      %v360 = vunpack.c.l.b16 %v212
      %v361 = vunpack.c.l.b16 %v213
      %v362 = vunpack.c.l.b16 %v214
      %v363 = vunpack.c.l.b16 %v215
      %v364 = vunpack.c.l.b16 %v216
      %v365 = vunpack.c.l.b16 %v217
      %v366 = vunpack.c.l.b16 %v218
      %v367 = vunpack.c.l.b16 %v219
      %v368 = vunpack.c.l.b16 %v220
      %v369 = vunpack.c.l.b16 %v221
      %v370 = vunpack.c.l.b16 %v222
      %v371 = vunpack.c.l.b16 %v223
      %v372 = vunpack.c.l.b16 %v224
      %v373 = vunpack.c.l.b16 %v225
      %v374 = vunpack.c.l.b16 %v226
      %v375 = vunpack.c.l.b16 %v227
      %v376 = vunpack.c.l.b16 %v228
      %v377 = vunpack.c.l.b16 %v229
      %v378 = vunpack.c.l.b16 %v230
      %v379 = vunpack.c.l.b16 %v231
      %v380 = vunpack.c.l.b16 %v232
      %v381 = vunpack.c.l.b16 %v233
      %v382 = vunpack.c.l.b16 %v234
      %v383 = vunpack.c.l.b16 %v235
      %v384 = vunpack.c.l.b16 %v236
      %v385 = vunpack.c.l.b16 %v237
      %v386 = vunpack.c.l.b16 %v238
      %v387 = vunpack.c.l.b16 %v239
      %v388 = vunpack.c.l.b16 %v240
      %v389 = vunpack.c.l.b16 %v241
      %v390 = vunpack.c.l.b16 %v242
      %v391 = vunpack.c.l.b16 %v243
      %v392 = vunpack.c.l.b16 %v244
      %v393 = vunpack.c.l.b16 %v245
      %v394 = vunpack.c.l.b16 %v246
      %v395 = vunpack.c.l.b16 %v247
      %v396 = vunpack.c.l.b16 %v248
      %v397 = vunpack.c.l.b16 %v249
      %v398 = vunpack.c.l.b16 %v250
      %v399 = vunpack.c.l.b16 %v251
      %v400 = vunpack.c.l.b16 %v252
      %v401 = vunpack.c.l.b16 %v253
      %v402 = vunpack.c.l.b16 %v254
      %v403 = vunpack.c.l.b16 %v255
      %v404 = vunpack.c.l.b16 %v256
      %v405 = vpack.c.b16 %v342, %v341
      %v406 = vpack.c.b16 %v344, %v343
      %v407 = vpack.c.b16 %v346, %v345
      %v408 = vpack.c.b16 %v348, %v347
      %v409 = vpack.c.b16 %v350, %v349
      %v410 = vpack.c.b16 %v352, %v351
      %v411 = vpack.c.b16 %v354, %v353
      %v412 = vpack.c.b16 %v356, %v355
      %v413 = vpack.c.b16 %v358, %v357
      %v414 = vpack.c.b16 %v360, %v359
      %v415 = vpack.c.b16 %v362, %v361
      %v416 = vpack.c.b16 %v364, %v363
      %v417 = vpack.c.b16 %v366, %v365
      %v418 = vpack.c.b16 %v368, %v367
      %v419 = vpack.c.b16 %v370, %v369
      %v420 = vpack.c.b16 %v372, %v371
      %v421 = vpack.c.b16 %v374, %v373
      %v422 = vpack.c.b16 %v376, %v375
      %v423 = vpack.c.b16 %v378, %v377
      %v424 = vpack.c.b16 %v380, %v379
      %v425 = vpack.c.b16 %v382, %v381
      %v426 = vpack.c.b16 %v384, %v383
      %v427 = vpack.c.b16 %v386, %v385
      %v428 = vpack.c.b16 %v388, %v387
      %v429 = vpack.c.b16 %v390, %v389
      %v430 = vpack.c.b16 %v392, %v391
      %v431 = vpack.c.b16 %v394, %v393
      %v432 = vpack.c.b16 %v396, %v395
      %v433 = vpack.c.b16 %v398, %v397
      %v434 = vpack.c.b16 %v400, %v399
      %v435 = vpack.c.b16 %v402, %v401
      %v436 = vpack.c.b16 %v404, %v403
      %469 = vmatprep.subr.bf16.mxu0 0
      %470 = vmatpush1.bf16.msra.mxu0 %v405
      %471 = vmatprep.subr.bf16.mxu0 0
      %472 = vmatpush1.bf16.msra.mxu0 %v406
      %473 = vmatprep.subr.bf16.mxu0 0
      %474 = vmatpush1.bf16.msra.mxu0 %v407
      %475 = vmatprep.subr.bf16.mxu0 0
      %476 = vmatpush1.bf16.msra.mxu0 %v408
      %477 = vmatprep.subr.bf16.mxu0 0
      %478 = vmatpush1.bf16.msra.mxu0 %v409
      %479 = vmatprep.subr.bf16.mxu0 0
      %480 = vmatpush1.bf16.msra.mxu0 %v410
      %481 = vmatprep.subr.bf16.mxu0 0
      %482 = vmatpush1.bf16.msra.mxu0 %v411
      %483 = vmatprep.subr.bf16.mxu0 0
      %484 = vmatpush1.bf16.msra.mxu0 %v412
      %485 = vmatprep.subr.bf16.mxu0 0
      %486 = vmatpush1.bf16.msra.mxu0 %v413
      %487 = vmatprep.subr.bf16.mxu0 0
      %488 = vmatpush1.bf16.msra.mxu0 %v414
      %489 = vmatprep.subr.bf16.mxu0 0
      %490 = vmatpush1.bf16.msra.mxu0 %v415
      %491 = vmatprep.subr.bf16.mxu0 0
      %492 = vmatpush1.bf16.msra.mxu0 %v416
      %493 = vmatprep.subr.bf16.mxu0 0
      %494 = vmatpush1.bf16.msra.mxu0 %v417
      %495 = vmatprep.subr.bf16.mxu0 0
      %496 = vmatpush1.bf16.msra.mxu0 %v418
      %497 = vmatprep.subr.bf16.mxu0 0
      %498 = vmatpush1.bf16.msra.mxu0 %v419
      %499 = vmatprep.subr.bf16.mxu0 0
      %500 = vmatpush1.bf16.msra.mxu0 %v420
      %501 = vmatprep.mubr.bf16.mxu0 %v270
      %502 = vmatmul.mubr.bf16.gmra.mrb[0].mxu0 %v269
      %v503 = vpop.f32.mrb[0].mxu0
      %v504 = vadd.f32 0.0, %v503
      %v505 = vpop.f32.mrb[0].mxu0
      %v506 = vpop.f32.mrb[0].mxu0
      %v507 = vadd.f32 0.0, %v506
      %v508 = vpop.f32.mrb[0].mxu0
      %509 = vdwg.mxu0
      %510 = vmatprep.subr.bf16.mxu0 0
      %511 = vmatpush1.bf16.msra.mxu0 %v421
      %512 = vmatprep.subr.bf16.mxu0 0
      %513 = vmatpush1.bf16.msra.mxu0 %v422
      %514 = vmatprep.subr.bf16.mxu0 0
      %515 = vmatpush1.bf16.msra.mxu0 %v423
      %516 = vmatprep.subr.bf16.mxu0 0
      %517 = vmatpush1.bf16.msra.mxu0 %v424
      %518 = vmatprep.subr.bf16.mxu0 0
      %519 = vmatpush1.bf16.msra.mxu0 %v425
      %520 = vmatprep.subr.bf16.mxu0 0
      %521 = vmatpush1.bf16.msra.mxu0 %v426
      %522 = vmatprep.subr.bf16.mxu0 0
      %523 = vmatpush1.bf16.msra.mxu0 %v427
      %524 = vmatprep.subr.bf16.mxu0 0
      %525 = vmatpush1.bf16.msra.mxu0 %v428
      %526 = vmatprep.subr.bf16.mxu0 0
      %527 = vmatpush1.bf16.msra.mxu0 %v429
      %528 = vmatprep.subr.bf16.mxu0 0
      %529 = vmatpush1.bf16.msra.mxu0 %v430
      %530 = vmatprep.subr.bf16.mxu0 0
      %531 = vmatpush1.bf16.msra.mxu0 %v431
      %532 = vmatprep.subr.bf16.mxu0 0
      %533 = vmatpush1.bf16.msra.mxu0 %v432
      %534 = vmatprep.subr.bf16.mxu0 0
      %535 = vmatpush1.bf16.msra.mxu0 %v433
      %536 = vmatprep.subr.bf16.mxu0 0
      %537 = vmatpush1.bf16.msra.mxu0 %v434
      %538 = vmatprep.subr.bf16.mxu0 0
      %539 = vmatpush1.bf16.msra.mxu0 %v435
      %540 = vmatprep.subr.bf16.mxu0 0
      %541 = vmatpush1.bf16.msra.mxu0 %v436
      %542 = vmatprep.mubr.bf16.mxu0 %v272
      %543 = vmatmul.mubr.bf16.gmra.mrb[0].mxu0 %v271
      %v544 = vpop.f32.mrb[0].mxu0
      %v545 = vadd.f32 %v504, %v544
      %v546 = vpop.f32.mrb[0].mxu0
      %v547 = vpop.f32.mrb[0].mxu0
      %v548 = vadd.f32 %v507, %v547
      %v549 = vpop.f32.mrb[0].mxu0
      %550 = vdwg.mxu0
      %551 = vst [vmem:[%s182] sm:$0xff] %v545
      %552 = vst [vmem:[%s182 + $0x8] sm:$0xff] %v548
      %v553 = vadd.f32 %v545, %v548
      %v554 = vrot.slane %v553, 4
      %v555 = vadd.f32 %v553, %v554
      %v556 = vrot.slane %v555, 2
      %v557 = vadd.f32 %v555, %v556
      %v558 = vrot.slane %v557, 1
      %v559 = vadd.f32 %v557, %v558
      %v560 = vmul.f32 %v545, %v545
      %v561 = vmul.f32 %v548, %v548
      %v562 = vadd.f32 %v560, %v561
      %v563 = vrot.slane %v562, 4
      %v564 = vadd.f32 %v562, %v563
      %v565 = vrot.slane %v564, 2
      %v566 = vadd.f32 %v564, %v565
      %v567 = vrot.slane %v566, 1
      %v568 = vadd.f32 %v566, %v567
      %vm569 = vcmask 1040384
      %v570 = vsel %vm569, %v559, %v568
      %571 = vst [vmem:[%s187] sm:$0x3] %v570
      %s572 = smul.u32 2, %s15
      %p573 = scmp.lt.s32.totalorder %s572, 3
      %s574 = scalar_select %p573, %s572, 3
      %s575 = smul.addr %s574, 8
      %s576 = scalar_lea.vmem %s2, %s575
      %p577 = scmp.lt.s32.totalorder %s15, 1
      %s578 = scalar_select %p577, %s15, 1
      %s579 = smul.addr %s578, 2
      %s580 = scalar_lea.vmem %s3, %s579
      // Predicated region
      $region29: #{discriminator_forward.7} parent=27 // pred_check
        %p581 = pneg %p80
      $region30: #{discriminator_forward.7} parent=27 // pred_check_branch
        %583 = sbr.rel (%p581) target = $region32
      $region31: #{discriminator_forward.7} parent=27 // pred_region
        %s584 = smul.u32 2, %s15
      $region32: #{discriminator_forward.7} parent=27 // pred_fallthru
        _
      // Predicated region
      $region33: #{discriminator_forward.7} parent=27 // pred_check
        %p585 = pneg %p106
      $region34: #{discriminator_forward.7} parent=27 // pred_check_branch
        %587 = sbr.rel (%p585) target = $region36
      $region35: #{discriminator_forward.7} parent=27 // pred_region
        _
      $region36: #{discriminator_forward.7} parent=27 // pred_fallthru
        _
    $region28: #{discriminator_forward.7} parent=5 // pred_fallthru
      _
    %p588 = scmp.le.s32.totalorder 2, %s10
    // Predicated region
    $region37: #{discriminator_forward.7} parent=5 // pred_check
      %p589 = pneg %p588
    $region38: #{discriminator_forward.7} parent=5 // pred_check_branch
      %591 = sbr.rel (%p589) target = $region40
    $region39: #{discriminator_forward.7} parent=5 // pred_region
      %s592 = ssub.s32 %s10, 2
      // Predicated region
      $region41: #{discriminator_forward.7} parent=39 // pred_check
        %p593 = pneg %p86
      $region42: #{discriminator_forward.7} parent=39 // pred_check_branch
        %595 = sbr.rel (%p593) target = $region44
      $region43: #{discriminator_forward.7} parent=39 // pred_region
        %s596 = smul.u32 2, %s16
        %p597 = scmp.lt.s32.totalorder %s596, 3
        %s598 = scalar_select %p597, %s596, 3
        %s599 = smul.addr %s598, 8
        %s600 = scalar_lea.vmem %s2, %s599
      $region44: #{discriminator_forward.7} parent=39 // pred_fallthru
        _
      // Predicated region
      $region45: #{discriminator_forward.7} parent=39 // pred_check
        %p601 = pneg %p112
      $region46: #{discriminator_forward.7} parent=39 // pred_check_branch
        %603 = sbr.rel (%p601) target = $region48
      $region47: #{discriminator_forward.7} parent=39 // pred_region
        %p604 = scmp.lt.s32.totalorder %s16, 1
        %s605 = scalar_select %p604, %s16, 1
        %s606 = smul.addr %s605, 2
        %s607 = scalar_lea.vmem %s3, %s606
      $region48: #{discriminator_forward.7} parent=39 // pred_fallthru
        _
    $region40: #{discriminator_forward.7} parent=5 // pred_fallthru
      _
  $region6: #{discriminator_forward.7} parent=0 // loop_footer
    %s14 = sadd.s32 1, %s10
  $region7: #{discriminator_forward.7} parent=0 // loop_footer_branch
    %9 = sbr.rel target = $region3
  $region8: #{discriminator_forward.7} parent=0 // loop_exit
    _

</llo_original>
